<compile_context>
chip_gen: v5e
topology: v5e:2x2
jax: 0.10.0
libtpu: 0.0.40
codegen_flags: <defaults>
</compile_context>

<pallas_src>
import functools
import math

import jax
import jax.numpy as jnp
from jax.experimental import pallas as pl
from jax.experimental.pallas import tpu as pltpu  # noqa: F401  (kept for TPU-specific tweaks)

# ----------------------------- tiny BERT config -----------------------------
VOCAB = 64
HIDDEN = 32
NUM_HEADS = 4
HEAD_DIM = HIDDEN // NUM_HEADS
INTERMEDIATE = 64
NUM_LAYERS = 2
MAX_POS = 16
TYPE_VOCAB = 2
NUM_LABELS = 2
LN_EPS = 1e-12


def _full_spec(shape):
    n = len(shape)
    return pl.BlockSpec(shape, lambda *_: (0,) * n)


# ------------------------- in-kernel helper functions ------------------------
def _layernorm(x, g, b):
    mu = jnp.mean(x, axis=-1, keepdims=True)
    xc = x - mu
    var = jnp.mean(xc * xc, axis=-1, keepdims=True)
    return xc * jax.lax.rsqrt(var + LN_EPS) * g + b


def _gelu(y):
    # TODO(synk): BERT's exact erf-based GELU replaced by tanh approximation
    # (tanh lowers via the EUP; erf lowering in Mosaic is not guaranteed).
    c = jnp.float32(0.7978845608028654)  # sqrt(2/pi)
    return 0.5 * y * (1.0 + jnp.tanh(c * (y + 0.044715 * y * y * y)))


# ------------------------------ fused kernel ---------------------------------
def _bert_fused_kernel(
    emb_ref,        # [B*S, H]        token+pos+type embeddings (pre-LN)
    mask_ref,       # [B, S]          attention mask (1.0 keep / 0.0 drop)
    qkv_w_ref,      # [L, H, 3H]      Q|K|V weights (Q pre-scaled by 1/sqrt(D))
    ffn_in_w_ref,   # [L, H, I]
    w_out_ref,      # [L, H+I, H]     rows 0..H-1 = attn o_w, rows H.. = ffn_out_w
    small_h_ref,    # [L, 6, H]       o_b, attn_ln_g, attn_ln_b, ffn_out_b, ffn_ln_g, ffn_ln_b
    wide_b_ref,     # [L, 2, 3H]      row0 = qkv_b (Q part pre-scaled), row1 = ffn_in_b (padded)
    misc_ref,       # [3+NUM_LABELS, H]  emb_ln_g, emb_ln_b, cls_b(padded), cls_w.T
    logits_ref,     # [B, NUM_LABELS]
    *, batch, seq,
):
    neg = jnp.float32(-1e9)
    misc = misc_ref[...]                                   # [5, H]

    # ---- embeddings -> LayerNorm (everything stays VMEM-resident from here) --
    h = _layernorm(emb_ref[...], misc[0:1, :], misc[1:2, :])          # [B*S, H]

    # Additive attention bias, broadcast to [S, S] ONCE per batch row and
    # hoisted out of the layer/head loops.
    biases = [
        jnp.broadcast_to((1.0 - mask_ref[b:b + 1, :]) * neg, (seq, seq))
        for b in range(batch)
    ]

    for l in range(NUM_LAYERS):  # static unroll over layers
        qkv_w = qkv_w_ref[l]                               # [H, 3H]
        wb = wide_b_ref[l]                                 # [2, 3H]
        qkv_b = wb[0:1, :]                                 # [1, 3H]
        ffn_in_b = wb[1:2, 0:INTERMEDIATE]                 # [1, I]
        w_out = w_out_ref[l]                               # [H+I, H]
        o_w = w_out[0:HIDDEN, :]                           # [H, H]
        ffn_out_w = w_out[HIDDEN:HIDDEN + INTERMEDIATE, :] # [I, H]
        sm = small_h_ref[l]                                # [6, H]
        o_b, attn_ln_g, attn_ln_b = sm[0:1, :], sm[1:2, :], sm[2:3, :]
        ffn_out_b, ffn_ln_g, ffn_ln_b = sm[3:4, :], sm[4:5, :], sm[5:6, :]

        # fused Q/K/V projection (scale already folded into Q weights/bias)
        qkv = jnp.dot(h, qkv_w, preferred_element_type=jnp.float32) + qkv_b
        q = qkv[:, 0 * HIDDEN:1 * HIDDEN]
        k = qkv[:, 1 * HIDDEN:2 * HIDDEN]
        v = qkv[:, 2 * HIDDEN:3 * HIDDEN]

        # multi-head attention: per-head lane slices hoisted out of the batch
        # loop; inside the batch loop only 8-row-aligned sublane slices.
        ctx_heads = []
        for hd in range(NUM_HEADS):
            c0, c1 = hd * HEAD_DIM, (hd + 1) * HEAD_DIM
            q_h = q[:, c0:c1]                              # [B*S, D]
            k_h = k[:, c0:c1]
            v_h = v[:, c0:c1]
            ctx_rows = []
            for b in range(batch):
                r0, r1 = b * seq, (b + 1) * seq
                s = jax.lax.dot_general(
                    q_h[r0:r1], k_h[r0:r1], (((1,), (1,)), ((), ())),
                    preferred_element_type=jnp.float32) + biases[b]     # [S, S]
                s = s - jnp.max(s, axis=-1, keepdims=True)
                p = jnp.exp(s)
                p = p * pl.reciprocal(jnp.sum(p, axis=-1, keepdims=True),
                                      approx=True)
                ctx_rows.append(jnp.dot(p, v_h[r0:r1],
                                        preferred_element_type=jnp.float32))  # [S, D]
            ctx_heads.append(jnp.concatenate(ctx_rows, axis=0))               # [B*S, D]
        ctx_all = jnp.concatenate(ctx_heads, axis=1)                           # [B*S, H]

        # single output-projection matmul per layer
        attn_out = jnp.dot(ctx_all, o_w, preferred_element_type=jnp.float32) + o_b
        h = _layernorm(attn_out + h, attn_ln_g, attn_ln_b)

        # feed-forward
        ff = _gelu(jnp.dot(h, ffn_in_w_ref[l],
                           preferred_element_type=jnp.float32) + ffn_in_b)
        ff_out = (jnp.dot(ff, ffn_out_w, preferred_element_type=jnp.float32)
                  + ffn_out_b)
        h = _layernorm(ff_out + h, ffn_ln_g, ffn_ln_b)

    # ---- classifier epilogue: select CLS rows first, one matmul, one store ---
    cls_rows = jnp.concatenate(
        [h[b * seq:b * seq + 1, :] for b in range(batch)], axis=0)    # [B, H]
    cls_wT = misc[3:3 + NUM_LABELS, :]                                # [L_cls, H]
    cls_b = misc[2:3, 0:NUM_LABELS]                                   # [1, L_cls]
    logits = jax.lax.dot_general(
        cls_rows, cls_wT, (((1,), (1,)), ((), ())),
        preferred_element_type=jnp.float32) + cls_b                   # [B, L_cls]
    logits_ref[...] = logits


# ------------------------------ parameters -----------------------------------
def init_params(key):
    def normal(k, shape):
        return jax.random.normal(k, shape, jnp.float32) * 0.02

    def dense_p(k, din, dout):
        return {"w": normal(k, (din, dout)), "b": jnp.zeros((dout,), jnp.float32)}

    keys = jax.random.split(key, 4 + NUM_LAYERS)
    params = {
        "word_emb": normal(keys[0], (VOCAB, HIDDEN)),
        "pos_emb": normal(keys[1], (MAX_POS, HIDDEN)),
        "type_emb": normal(keys[2], (TYPE_VOCAB, HIDDEN)),
        "emb_ln_g": jnp.ones((HIDDEN,), jnp.float32),
        "emb_ln_b": jnp.zeros((HIDDEN,), jnp.float32),
        "cls": dense_p(keys[3], HIDDEN, NUM_LABELS),
        "layers": [],
    }
    for i in range(NUM_LAYERS):
        lk = jax.random.split(keys[4 + i], 6)
        params["layers"].append(
            {
                "q": dense_p(lk[0], HIDDEN, HIDDEN),
                "k": dense_p(lk[1], HIDDEN, HIDDEN),
                "v": dense_p(lk[2], HIDDEN, HIDDEN),
                "o": dense_p(lk[3], HIDDEN, HIDDEN),
                "attn_ln_g": jnp.ones((HIDDEN,), jnp.float32),
                "attn_ln_b": jnp.zeros((HIDDEN,), jnp.float32),
                "ffn_in": dense_p(lk[4], HIDDEN, INTERMEDIATE),
                "ffn_out": dense_p(lk[5], INTERMEDIATE, HIDDEN),
                "ffn_ln_g": jnp.ones((HIDDEN,), jnp.float32),
                "ffn_ln_b": jnp.zeros((HIDDEN,), jnp.float32),
            }
        )
    return params


def pack_params(params):
    """One-time (host-side) weight packing; runs OUTSIDE the jitted forward.

    * Q weights/bias pre-scaled by 1/sqrt(HEAD_DIM).
    * All tiny [HIDDEN]-wide per-layer params collapsed into stacked slabs so
      the kernel has only 8 inputs (8 DMAs) instead of 18.
    """
    layers = params["layers"]
    inv = jnp.float32(1.0 / math.sqrt(HEAD_DIM))

    qkv_w = jnp.stack(
        [jnp.concatenate([l["q"]["w"] * inv, l["k"]["w"], l["v"]["w"]], axis=1)
         for l in layers], axis=0)                                      # [L, H, 3H]
    wide_b = jnp.stack(
        [jnp.stack(
            [jnp.concatenate([l["q"]["b"] * inv, l["k"]["b"], l["v"]["b"]], axis=0),
             jnp.pad(l["ffn_in"]["b"], (0, 3 * HIDDEN - INTERMEDIATE))],
            axis=0)
         for l in layers], axis=0)                                      # [L, 2, 3H]
    ffn_in_w = jnp.stack([l["ffn_in"]["w"] for l in layers], axis=0)    # [L, H, I]
    w_out = jnp.stack(
        [jnp.concatenate([l["o"]["w"], l["ffn_out"]["w"]], axis=0)
         for l in layers], axis=0)                                      # [L, H+I, H]
    small_h = jnp.stack(
        [jnp.stack([l["o"]["b"], l["attn_ln_g"], l["attn_ln_b"],
                    l["ffn_out"]["b"], l["ffn_ln_g"], l["ffn_ln_b"]], axis=0)
         for l in layers], axis=0)                                      # [L, 6, H]
    misc = jnp.concatenate(
        [params["emb_ln_g"][None, :],
         params["emb_ln_b"][None, :],
         jnp.pad(params["cls"]["b"], (0, HIDDEN - NUM_LABELS))[None, :],
         params["cls"]["w"].T], axis=0)                                 # [3+L_cls, H]

    return {
        "word_emb": params["word_emb"],
        "pos_emb": params["pos_emb"],
        "type_emb": params["type_emb"],
        "qkv_w": qkv_w,
        "ffn_in_w": ffn_in_w,
        "w_out": w_out,
        "small_h": small_h,
        "wide_b": wide_b,
        "misc": misc,
    }


# -------------------------------- forward ------------------------------------
@jax.jit
def bert_fv_forward(packed, input_ids, attention_mask, token_type_ids):
    B, S = input_ids.shape

    # Embedding lookups (gather) are glue, done in plain JAX.
    emb = (
        packed["word_emb"][input_ids]
        + packed["pos_emb"][jnp.arange(S)][None, :, :]
        + packed["type_emb"][token_type_ids]
    )
    emb2d = emb.reshape(B * S, HIDDEN).astype(jnp.float32)
    mask_f = attention_mask.astype(jnp.float32)

    inputs = [
        emb2d, mask_f,
        packed["qkv_w"], packed["ffn_in_w"], packed["w_out"],
        packed["small_h"], packed["wide_b"], packed["misc"],
    ]

    kernel = functools.partial(_bert_fused_kernel, batch=B, seq=S)
    logits = pl.pallas_call(
        kernel,
        out_shape=jax.ShapeDtypeStruct((B, NUM_LABELS), jnp.float32),
        in_specs=[_full_spec(a.shape) for a in inputs],
        out_specs=_full_spec((B, NUM_LABELS)),
    )(*inputs)
    return logits


# --------------------------- pure-JAX reference -------------------------------
def bert_fv_reference(params, input_ids, attention_mask, token_type_ids):
    B, S = input_ids.shape

    def ln(x, g, b):
        mu = jnp.mean(x, axis=-1, keepdims=True)
        var = jnp.mean(jnp.square(x - mu), axis=-1, keepdims=True)
        return (x - mu) * jax.lax.rsqrt(var + LN_EPS) * g + b

    def gelu(y):
        c = 0.7978845608028654
        return 0.5 * y * (1.0 + jnp.tanh(c * (y + 0.044715 * y ** 3)))

    emb = (params["word_emb"][input_ids]
           + params["pos_emb"][jnp.arange(S)][None, :, :]
           + params["type_emb"][token_type_ids])
    h = ln(emb, params["emb_ln_g"], params["emb_ln_b"])
    bias = (1.0 - attention_mask.astype(jnp.float32))[:, None, None, :] * -1e9

    def split(x):
        return x.reshape(B, S, NUM_HEADS, HEAD_DIM).transpose(0, 2, 1, 3)

    for layer in params["layers"]:
        q = split(h @ layer["q"]["w"] + layer["q"]["b"])
        k = split(h @ layer["k"]["w"] + layer["k"]["b"])
        v = split(h @ layer["v"]["w"] + layer["v"]["b"])
        s = jnp.einsum("bhqd,bhkd->bhqk", q, k) / math.sqrt(HEAD_DIM) + bias
        p = jax.nn.softmax(s, axis=-1)
        ctx = jnp.einsum("bhqk,bhkd->bhqd", p, v)
        ctx = ctx.transpose(0, 2, 1, 3).reshape(B, S, HIDDEN)
        attn_out = ctx @ layer["o"]["w"] + layer["o"]["b"]
        h = ln(attn_out + h, layer["attn_ln_g"], layer["attn_ln_b"])
        ff = gelu(h @ layer["ffn_in"]["w"] + layer["ffn_in"]["b"])
        ff_out = ff @ layer["ffn_out"]["w"] + layer["ffn_out"]["b"]
        h = ln(ff_out + h, layer["ffn_ln_g"], layer["ffn_ln_b"])

    cls = h[:, 0, :]
    return cls @ params["cls"]["w"] + params["cls"]["b"]


if __name__ == "__main__":
    key = jax.random.PRNGKey(0)
    pkey, dkey = jax.random.split(key)
    params = init_params(pkey)
    packed = pack_params(params)          # one-time packing, outside the jit

    B, S = 2, 8
    input_ids = jax.random.randint(dkey, (B, S), 0, VOCAB, dtype=jnp.int32)
    attention_mask = jnp.array([[1, 1, 1, 1, 1, 1, 1, 1],
                                [1, 1, 1, 1, 1, 1, 0, 0]], jnp.int32)
    token_type_ids = jnp.array([[0, 0, 0, 0, 1, 1, 1, 1],
                                [0, 0, 0, 0, 1, 1, 1, 1]], jnp.int32)

    logits = bert_fv_forward(packed, input_ids, attention_mask, token_type_ids)
    jax.block_until_ready(logits)
    assert logits.shape == (B, NUM_LABELS) and logits.dtype == jnp.float32

    ref = bert_fv_reference(params, input_ids, attention_mask, token_type_ids)
    assert jnp.allclose(logits, ref, atol=1e-2, rtol=1e-2), (logits, ref)
    print("KERNEL_OK")
</pallas_src>

<mosaic_0001>
module attributes {stable_mosaic.version = 11 : i64} {
  func.func @_bert_fused_kernel(%arg0: memref<16x32xf32, #tpu.memory_space<vmem>>, %arg1: memref<2x8xf32, #tpu.memory_space<vmem>>, %arg2: memref<2x32x96xf32, #tpu.memory_space<vmem>>, %arg3: memref<2x32x64xf32, #tpu.memory_space<vmem>>, %arg4: memref<2x96x32xf32, #tpu.memory_space<vmem>>, %arg5: memref<2x6x32xf32, #tpu.memory_space<vmem>>, %arg6: memref<2x2x96xf32, #tpu.memory_space<vmem>>, %arg7: memref<5x32xf32, #tpu.memory_space<vmem>>, %arg8: memref<2x2xf32, #tpu.memory_space<vmem>>) attributes {dimension_semantics = [], scalar_prefetch = 0 : i64, scratch_operands = 0 : i64, tpu.core_type = #tpu.core_type<tc>} {
    %c0 = arith.constant 0 : index
    %c0_0 = arith.constant 0 : index
    %0 = vector.load %arg7[%c0, %c0_0] : memref<5x32xf32, #tpu.memory_space<vmem>>, vector<5x32xf32>
    %c0_1 = arith.constant 0 : index
    %c0_2 = arith.constant 0 : index
    %1 = vector.load %arg0[%c0_1, %c0_2] : memref<16x32xf32, #tpu.memory_space<vmem>>, vector<16x32xf32>
    %2 = vector.extract_strided_slice %0 {offsets = [0, 0], sizes = [1, 32], strides = [1, 1]} : vector<5x32xf32> to vector<1x32xf32>
    %3 = vector.extract_strided_slice %0 {offsets = [1, 0], sizes = [1, 32], strides = [1, 1]} : vector<5x32xf32> to vector<1x32xf32>
    %cst = arith.constant dense<0.000000e+00> : vector<16xf32>
    %4 = vector.multi_reduction <add>, %1, %cst [1] : vector<16x32xf32> to vector<16xf32>
    %5 = vector.shape_cast %4 : vector<16xf32> to vector<16x1xf32>
    %cst_3 = arith.constant 3.200000e+01 : f32
    %6 = vector.broadcast %cst_3 : f32 to vector<16x1xf32>
    %7 = arith.divf %5, %6 : vector<16x1xf32>
    %8 = vector.broadcast %7 : vector<16x1xf32> to vector<16x32xf32>
    %9 = arith.subf %1, %8 : vector<16x32xf32>
    %10 = arith.mulf %9, %9 : vector<16x32xf32>
    %cst_4 = arith.constant dense<0.000000e+00> : vector<16xf32>
    %11 = vector.multi_reduction <add>, %10, %cst_4 [1] : vector<16x32xf32> to vector<16xf32>
    %12 = vector.shape_cast %11 : vector<16xf32> to vector<16x1xf32>
    %cst_5 = arith.constant 3.200000e+01 : f32
    %13 = vector.broadcast %cst_5 : f32 to vector<16x1xf32>
    %14 = arith.divf %12, %13 : vector<16x1xf32>
    %cst_6 = arith.constant 9.99999996E-13 : f32
    %15 = vector.broadcast %cst_6 : f32 to vector<16x1xf32>
    %16 = arith.addf %14, %15 : vector<16x1xf32>
    %17 = math.rsqrt %16 : vector<16x1xf32>
    %18 = vector.broadcast %17 : vector<16x1xf32> to vector<16x32xf32>
    %19 = arith.mulf %9, %18 : vector<16x32xf32>
    %20 = vector.broadcast %2 : vector<1x32xf32> to vector<16x32xf32>
    %21 = arith.mulf %19, %20 : vector<16x32xf32>
    %22 = vector.broadcast %3 : vector<1x32xf32> to vector<16x32xf32>
    %23 = arith.addf %21, %22 : vector<16x32xf32>
    %c0_7 = arith.constant 0 : index
    %c0_8 = arith.constant 0 : index
    %24 = vector.load %arg1[%c0_7, %c0_8] : memref<2x8xf32, #tpu.memory_space<vmem>>, vector<1x8xf32>
    %cst_9 = arith.constant 1.000000e+00 : f32
    %25 = vector.broadcast %cst_9 : f32 to vector<1x8xf32>
    %26 = arith.subf %25, %24 : vector<1x8xf32>
    %cst_10 = arith.constant -1.000000e+09 : f32
    %27 = vector.broadcast %cst_10 : f32 to vector<1x8xf32>
    %28 = arith.mulf %26, %27 : vector<1x8xf32>
    %29 = vector.shape_cast %28 : vector<1x8xf32> to vector<1x8xf32>
    %30 = vector.broadcast %29 : vector<1x8xf32> to vector<8x8xf32>
    %c1 = arith.constant 1 : index
    %c0_11 = arith.constant 0 : index
    %31 = vector.load %arg1[%c1, %c0_11] : memref<2x8xf32, #tpu.memory_space<vmem>>, vector<1x8xf32>
    %cst_12 = arith.constant 1.000000e+00 : f32
    %32 = vector.broadcast %cst_12 : f32 to vector<1x8xf32>
    %33 = arith.subf %32, %31 : vector<1x8xf32>
    %cst_13 = arith.constant -1.000000e+09 : f32
    %34 = vector.broadcast %cst_13 : f32 to vector<1x8xf32>
    %35 = arith.mulf %33, %34 : vector<1x8xf32>
    %36 = vector.shape_cast %35 : vector<1x8xf32> to vector<1x8xf32>
    %37 = vector.broadcast %36 : vector<1x8xf32> to vector<8x8xf32>
    %c0_14 = arith.constant 0 : index
    %c0_15 = arith.constant 0 : index
    %c0_16 = arith.constant 0 : index
    %38 = vector.load %arg2[%c0_14, %c0_15, %c0_16] : memref<2x32x96xf32, #tpu.memory_space<vmem>>, vector<1x32x96xf32>
    %39 = vector.shape_cast %38 : vector<1x32x96xf32> to vector<32x96xf32>
    %c0_17 = arith.constant 0 : index
    %c0_18 = arith.constant 0 : index
    %c0_19 = arith.constant 0 : index
    %40 = vector.load %arg6[%c0_17, %c0_18, %c0_19] : memref<2x2x96xf32, #tpu.memory_space<vmem>>, vector<1x2x96xf32>
    %41 = vector.shape_cast %40 : vector<1x2x96xf32> to vector<2x96xf32>
    %42 = vector.extract_strided_slice %41 {offsets = [0, 0], sizes = [1, 96], strides = [1, 1]} : vector<2x96xf32> to vector<1x96xf32>
    %43 = vector.extract_strided_slice %41 {offsets = [1, 0], sizes = [1, 64], strides = [1, 1]} : vector<2x96xf32> to vector<1x64xf32>
    %c0_20 = arith.constant 0 : index
    %c0_21 = arith.constant 0 : index
    %c0_22 = arith.constant 0 : index
    %44 = vector.load %arg4[%c0_20, %c0_21, %c0_22] : memref<2x96x32xf32, #tpu.memory_space<vmem>>, vector<1x96x32xf32>
    %45 = vector.shape_cast %44 : vector<1x96x32xf32> to vector<96x32xf32>
    %46 = vector.extract_strided_slice %45 {offsets = [0, 0], sizes = [32, 32], strides = [1, 1]} : vector<96x32xf32> to vector<32x32xf32>
    %47 = vector.extract_strided_slice %45 {offsets = [32, 0], sizes = [64, 32], strides = [1, 1]} : vector<96x32xf32> to vector<64x32xf32>
    %c0_23 = arith.constant 0 : index
    %c0_24 = arith.constant 0 : index
    %c0_25 = arith.constant 0 : index
    %48 = vector.load %arg5[%c0_23, %c0_24, %c0_25] : memref<2x6x32xf32, #tpu.memory_space<vmem>>, vector<1x6x32xf32>
    %49 = vector.shape_cast %48 : vector<1x6x32xf32> to vector<6x32xf32>
    %50 = vector.extract_strided_slice %49 {offsets = [0, 0], sizes = [1, 32], strides = [1, 1]} : vector<6x32xf32> to vector<1x32xf32>
    %51 = vector.extract_strided_slice %49 {offsets = [1, 0], sizes = [1, 32], strides = [1, 1]} : vector<6x32xf32> to vector<1x32xf32>
    %52 = vector.extract_strided_slice %49 {offsets = [2, 0], sizes = [1, 32], strides = [1, 1]} : vector<6x32xf32> to vector<1x32xf32>
    %53 = vector.extract_strided_slice %49 {offsets = [3, 0], sizes = [1, 32], strides = [1, 1]} : vector<6x32xf32> to vector<1x32xf32>
    %54 = vector.extract_strided_slice %49 {offsets = [4, 0], sizes = [1, 32], strides = [1, 1]} : vector<6x32xf32> to vector<1x32xf32>
    %55 = vector.extract_strided_slice %49 {offsets = [5, 0], sizes = [1, 32], strides = [1, 1]} : vector<6x32xf32> to vector<1x32xf32>
    %cst_26 = arith.constant dense<0.000000e+00> : vector<16x96xf32>
    %56 = tpu.matmul %23, %39, %cst_26 {dimension_numbers = #tpu.dot_dimension_numbers<[1], [0], [0], [1], [0, 0, 1, 1], [], []>} : vector<16x32xf32>, vector<32x96xf32>, vector<16x96xf32> -> vector<16x96xf32>
    %57 = vector.broadcast %42 : vector<1x96xf32> to vector<16x96xf32>
    %58 = arith.addf %56, %57 : vector<16x96xf32>
    %59 = vector.extract_strided_slice %58 {offsets = [0, 0], sizes = [16, 32], strides = [1, 1]} : vector<16x96xf32> to vector<16x32xf32>
    %60 = vector.extract_strided_slice %58 {offsets = [0, 32], sizes = [16, 32], strides = [1, 1]} : vector<16x96xf32> to vector<16x32xf32>
    %61 = vector.extract_strided_slice %58 {offsets = [0, 64], sizes = [16, 32], strides = [1, 1]} : vector<16x96xf32> to vector<16x32xf32>
    %62 = vector.extract_strided_slice %59 {offsets = [0, 0], sizes = [16, 8], strides = [1, 1]} : vector<16x32xf32> to vector<16x8xf32>
    %63 = vector.extract_strided_slice %60 {offsets = [0, 0], sizes = [16, 8], strides = [1, 1]} : vector<16x32xf32> to vector<16x8xf32>
    %64 = vector.extract_strided_slice %61 {offsets = [0, 0], sizes = [16, 8], strides = [1, 1]} : vector<16x32xf32> to vector<16x8xf32>
    %65 = vector.extract_strided_slice %62 {offsets = [0, 0], sizes = [8, 8], strides = [1, 1]} : vector<16x8xf32> to vector<8x8xf32>
    %66 = vector.extract_strided_slice %63 {offsets = [0, 0], sizes = [8, 8], strides = [1, 1]} : vector<16x8xf32> to vector<8x8xf32>
    %cst_27 = arith.constant dense<0.000000e+00> : vector<8x8xf32>
    %67 = tpu.matmul %65, %66, %cst_27 {dimension_numbers = #tpu.dot_dimension_numbers<[1], [1], [0], [0], [0, 0, 1, 0], [], []>} : vector<8x8xf32>, vector<8x8xf32>, vector<8x8xf32> -> vector<8x8xf32>
    %68 = arith.addf %67, %30 : vector<8x8xf32>
    %cst_28 = arith.constant dense<0xFF800000> : vector<8xf32>
    %69 = vector.multi_reduction <maximumf>, %68, %cst_28 [1] : vector<8x8xf32> to vector<8xf32>
    %70 = vector.shape_cast %69 : vector<8xf32> to vector<8x1xf32>
    %71 = vector.broadcast %70 : vector<8x1xf32> to vector<8x8xf32>
    %72 = arith.subf %68, %71 : vector<8x8xf32>
    %73 = math.exp %72 : vector<8x8xf32>
    %cst_29 = arith.constant dense<0.000000e+00> : vector<8xf32>
    %74 = vector.multi_reduction <add>, %73, %cst_29 [1] : vector<8x8xf32> to vector<8xf32>
    %75 = vector.shape_cast %74 : vector<8xf32> to vector<8x1xf32>
    %76 = tpu.reciprocal %75 {approx = true} : vector<8x1xf32> -> vector<8x1xf32>
    %77 = vector.broadcast %76 : vector<8x1xf32> to vector<8x8xf32>
    %78 = arith.mulf %73, %77 : vector<8x8xf32>
    %79 = vector.extract_strided_slice %64 {offsets = [0, 0], sizes = [8, 8], strides = [1, 1]} : vector<16x8xf32> to vector<8x8xf32>
    %cst_30 = arith.constant dense<0.000000e+00> : vector<8x8xf32>
    %80 = tpu.matmul %78, %79, %cst_30 {dimension_numbers = #tpu.dot_dimension_numbers<[1], [0], [0], [1], [0, 0, 1, 1], [], []>} : vector<8x8xf32>, vector<8x8xf32>, vector<8x8xf32> -> vector<8x8xf32>
    %81 = vector.extract_strided_slice %62 {offsets = [8, 0], sizes = [8, 8], strides = [1, 1]} : vector<16x8xf32> to vector<8x8xf32>
    %82 = vector.extract_strided_slice %63 {offsets = [8, 0], sizes = [8, 8], strides = [1, 1]} : vector<16x8xf32> to vector<8x8xf32>
    %cst_31 = arith.constant dense<0.000000e+00> : vector<8x8xf32>
    %83 = tpu.matmul %81, %82, %cst_31 {dimension_numbers = #tpu.dot_dimension_numbers<[1], [1], [0], [0], [0, 0, 1, 0], [], []>} : vector<8x8xf32>, vector<8x8xf32>, vector<8x8xf32> -> vector<8x8xf32>
    %84 = arith.addf %83, %37 : vector<8x8xf32>
    %cst_32 = arith.constant dense<0xFF800000> : vector<8xf32>
    %85 = vector.multi_reduction <maximumf>, %84, %cst_32 [1] : vector<8x8xf32> to vector<8xf32>
    %86 = vector.shape_cast %85 : vector<8xf32> to vector<8x1xf32>
    %87 = vector.broadcast %86 : vector<8x1xf32> to vector<8x8xf32>
    %88 = arith.subf %84, %87 : vector<8x8xf32>
    %89 = math.exp %88 : vector<8x8xf32>
    %cst_33 = arith.constant dense<0.000000e+00> : vector<8xf32>
    %90 = vector.multi_reduction <add>, %89, %cst_33 [1] : vector<8x8xf32> to vector<8xf32>
    %91 = vector.shape_cast %90 : vector<8xf32> to vector<8x1xf32>
    %92 = tpu.reciprocal %91 {approx = true} : vector<8x1xf32> -> vector<8x1xf32>
    %93 = vector.broadcast %92 : vector<8x1xf32> to vector<8x8xf32>
    %94 = arith.mulf %89, %93 : vector<8x8xf32>
    %95 = vector.extract_strided_slice %64 {offsets = [8, 0], sizes = [8, 8], strides = [1, 1]} : vector<16x8xf32> to vector<8x8xf32>
    %cst_34 = arith.constant dense<0.000000e+00> : vector<8x8xf32>
    %96 = tpu.matmul %94, %95, %cst_34 {dimension_numbers = #tpu.dot_dimension_numbers<[1], [0], [0], [1], [0, 0, 1, 1], [], []>} : vector<8x8xf32>, vector<8x8xf32>, vector<8x8xf32> -> vector<8x8xf32>
    %97 = tpu.concatenate %80, %96 in 0 : vector<8x8xf32>, vector<8x8xf32> -> vector<16x8xf32>
    %98 = vector.extract_strided_slice %59 {offsets = [0, 8], sizes = [16, 8], strides = [1, 1]} : vector<16x32xf32> to vector<16x8xf32>
    %99 = vector.extract_strided_slice %60 {offsets = [0, 8], sizes = [16, 8], strides = [1, 1]} : vector<16x32xf32> to vector<16x8xf32>
    %100 = vector.extract_strided_slice %61 {offsets = [0, 8], sizes = [16, 8], strides = [1, 1]} : vector<16x32xf32> to vector<16x8xf32>
    %101 = vector.extract_strided_slice %98 {offsets = [0, 0], sizes = [8, 8], strides = [1, 1]} : vector<16x8xf32> to vector<8x8xf32>
    %102 = vector.extract_strided_slice %99 {offsets = [0, 0], sizes = [8, 8], strides = [1, 1]} : vector<16x8xf32> to vector<8x8xf32>
    %cst_35 = arith.constant dense<0.000000e+00> : vector<8x8xf32>
    %103 = tpu.matmul %101, %102, %cst_35 {dimension_numbers = #tpu.dot_dimension_numbers<[1], [1], [0], [0], [0, 0, 1, 0], [], []>} : vector<8x8xf32>, vector<8x8xf32>, vector<8x8xf32> -> vector<8x8xf32>
    %104 = arith.addf %103, %30 : vector<8x8xf32>
    %cst_36 = arith.constant dense<0xFF800000> : vector<8xf32>
    %105 = vector.multi_reduction <maximumf>, %104, %cst_36 [1] : vector<8x8xf32> to vector<8xf32>
    %106 = vector.shape_cast %105 : vector<8xf32> to vector<8x1xf32>
    %107 = vector.broadcast %106 : vector<8x1xf32> to vector<8x8xf32>
    %108 = arith.subf %104, %107 : vector<8x8xf32>
    %109 = math.exp %108 : vector<8x8xf32>
    %cst_37 = arith.constant dense<0.000000e+00> : vector<8xf32>
    %110 = vector.multi_reduction <add>, %109, %cst_37 [1] : vector<8x8xf32> to vector<8xf32>
    %111 = vector.shape_cast %110 : vector<8xf32> to vector<8x1xf32>
    %112 = tpu.reciprocal %111 {approx = true} : vector<8x1xf32> -> vector<8x1xf32>
    %113 = vector.broadcast %112 : vector<8x1xf32> to vector<8x8xf32>
    %114 = arith.mulf %109, %113 : vector<8x8xf32>
    %115 = vector.extract_strided_slice %100 {offsets = [0, 0], sizes = [8, 8], strides = [1, 1]} : vector<16x8xf32> to vector<8x8xf32>
    %cst_38 = arith.constant dense<0.000000e+00> : vector<8x8xf32>
    %116 = tpu.matmul %114, %115, %cst_38 {dimension_numbers = #tpu.dot_dimension_numbers<[1], [0], [0], [1], [0, 0, 1, 1], [], []>} : vector<8x8xf32>, vector<8x8xf32>, vector<8x8xf32> -> vector<8x8xf32>
    %117 = vector.extract_strided_slice %98 {offsets = [8, 0], sizes = [8, 8], strides = [1, 1]} : vector<16x8xf32> to vector<8x8xf32>
    %118 = vector.extract_strided_slice %99 {offsets = [8, 0], sizes = [8, 8], strides = [1, 1]} : vector<16x8xf32> to vector<8x8xf32>
    %cst_39 = arith.constant dense<0.000000e+00> : vector<8x8xf32>
    %119 = tpu.matmul %117, %118, %cst_39 {dimension_numbers = #tpu.dot_dimension_numbers<[1], [1], [0], [0], [0, 0, 1, 0], [], []>} : vector<8x8xf32>, vector<8x8xf32>, vector<8x8xf32> -> vector<8x8xf32>
    %120 = arith.addf %119, %37 : vector<8x8xf32>
    %cst_40 = arith.constant dense<0xFF800000> : vector<8xf32>
    %121 = vector.multi_reduction <maximumf>, %120, %cst_40 [1] : vector<8x8xf32> to vector<8xf32>
    %122 = vector.shape_cast %121 : vector<8xf32> to vector<8x1xf32>
    %123 = vector.broadcast %122 : vector<8x1xf32> to vector<8x8xf32>
    %124 = arith.subf %120, %123 : vector<8x8xf32>
    %125 = math.exp %124 : vector<8x8xf32>
    %cst_41 = arith.constant dense<0.000000e+00> : vector<8xf32>
    %126 = vector.multi_reduction <add>, %125, %cst_41 [1] : vector<8x8xf32> to vector<8xf32>
    %127 = vector.shape_cast %126 : vector<8xf32> to vector<8x1xf32>
    %128 = tpu.reciprocal %127 {approx = true} : vector<8x1xf32> -> vector<8x1xf32>
    %129 = vector.broadcast %128 : vector<8x1xf32> to vector<8x8xf32>
    %130 = arith.mulf %125, %129 : vector<8x8xf32>
    %131 = vector.extract_strided_slice %100 {offsets = [8, 0], sizes = [8, 8], strides = [1, 1]} : vector<16x8xf32> to vector<8x8xf32>
    %cst_42 = arith.constant dense<0.000000e+00> : vector<8x8xf32>
    %132 = tpu.matmul %130, %131, %cst_42 {dimension_numbers = #tpu.dot_dimension_numbers<[1], [0], [0], [1], [0, 0, 1, 1], [], []>} : vector<8x8xf32>, vector<8x8xf32>, vector<8x8xf32> -> vector<8x8xf32>
    %133 = tpu.concatenate %116, %132 in 0 : vector<8x8xf32>, vector<8x8xf32> -> vector<16x8xf32>
    %134 = vector.extract_strided_slice %59 {offsets = [0, 16], sizes = [16, 8], strides = [1, 1]} : vector<16x32xf32> to vector<16x8xf32>
    %135 = vector.extract_strided_slice %60 {offsets = [0, 16], sizes = [16, 8], strides = [1, 1]} : vector<16x32xf32> to vector<16x8xf32>
    %136 = vector.extract_strided_slice %61 {offsets = [0, 16], sizes = [16, 8], strides = [1, 1]} : vector<16x32xf32> to vector<16x8xf32>
    %137 = vector.extract_strided_slice %134 {offsets = [0, 0], sizes = [8, 8], strides = [1, 1]} : vector<16x8xf32> to vector<8x8xf32>
    %138 = vector.extract_strided_slice %135 {offsets = [0, 0], sizes = [8, 8], strides = [1, 1]} : vector<16x8xf32> to vector<8x8xf32>
    %cst_43 = arith.constant dense<0.000000e+00> : vector<8x8xf32>
    %139 = tpu.matmul %137, %138, %cst_43 {dimension_numbers = #tpu.dot_dimension_numbers<[1], [1], [0], [0], [0, 0, 1, 0], [], []>} : vector<8x8xf32>, vector<8x8xf32>, vector<8x8xf32> -> vector<8x8xf32>
    %140 = arith.addf %139, %30 : vector<8x8xf32>
    %cst_44 = arith.constant dense<0xFF800000> : vector<8xf32>
    %141 = vector.multi_reduction <maximumf>, %140, %cst_44 [1] : vector<8x8xf32> to vector<8xf32>
    %142 = vector.shape_cast %141 : vector<8xf32> to vector<8x1xf32>
    %143 = vector.broadcast %142 : vector<8x1xf32> to vector<8x8xf32>
    %144 = arith.subf %140, %143 : vector<8x8xf32>
    %145 = math.exp %144 : vector<8x8xf32>
    %cst_45 = arith.constant dense<0.000000e+00> : vector<8xf32>
    %146 = vector.multi_reduction <add>, %145, %cst_45 [1] : vector<8x8xf32> to vector<8xf32>
    %147 = vector.shape_cast %146 : vector<8xf32> to vector<8x1xf32>
    %148 = tpu.reciprocal %147 {approx = true} : vector<8x1xf32> -> vector<8x1xf32>
    %149 = vector.broadcast %148 : vector<8x1xf32> to vector<8x8xf32>
    %150 = arith.mulf %145, %149 : vector<8x8xf32>
    %151 = vector.extract_strided_slice %136 {offsets = [0, 0], sizes = [8, 8], strides = [1, 1]} : vector<16x8xf32> to vector<8x8xf32>
    %cst_46 = arith.constant dense<0.000000e+00> : vector<8x8xf32>
    %152 = tpu.matmul %150, %151, %cst_46 {dimension_numbers = #tpu.dot_dimension_numbers<[1], [0], [0], [1], [0, 0, 1, 1], [], []>} : vector<8x8xf32>, vector<8x8xf32>, vector<8x8xf32> -> vector<8x8xf32>
    %153 = vector.extract_strided_slice %134 {offsets = [8, 0], sizes = [8, 8], strides = [1, 1]} : vector<16x8xf32> to vector<8x8xf32>
    %154 = vector.extract_strided_slice %135 {offsets = [8, 0], sizes = [8, 8], strides = [1, 1]} : vector<16x8xf32> to vector<8x8xf32>
    %cst_47 = arith.constant dense<0.000000e+00> : vector<8x8xf32>
    %155 = tpu.matmul %153, %154, %cst_47 {dimension_numbers = #tpu.dot_dimension_numbers<[1], [1], [0], [0], [0, 0, 1, 0], [], []>} : vector<8x8xf32>, vector<8x8xf32>, vector<8x8xf32> -> vector<8x8xf32>
    %156 = arith.addf %155, %37 : vector<8x8xf32>
    %cst_48 = arith.constant dense<0xFF800000> : vector<8xf32>
    %157 = vector.multi_reduction <maximumf>, %156, %cst_48 [1] : vector<8x8xf32> to vector<8xf32>
    %158 = vector.shape_cast %157 : vector<8xf32> to vector<8x1xf32>
    %159 = vector.broadcast %158 : vector<8x1xf32> to vector<8x8xf32>
    %160 = arith.subf %156, %159 : vector<8x8xf32>
    %161 = math.exp %160 : vector<8x8xf32>
    %cst_49 = arith.constant dense<0.000000e+00> : vector<8xf32>
    %162 = vector.multi_reduction <add>, %161, %cst_49 [1] : vector<8x8xf32> to vector<8xf32>
    %163 = vector.shape_cast %162 : vector<8xf32> to vector<8x1xf32>
    %164 = tpu.reciprocal %163 {approx = true} : vector<8x1xf32> -> vector<8x1xf32>
    %165 = vector.broadcast %164 : vector<8x1xf32> to vector<8x8xf32>
    %166 = arith.mulf %161, %165 : vector<8x8xf32>
    %167 = vector.extract_strided_slice %136 {offsets = [8, 0], sizes = [8, 8], strides = [1, 1]} : vector<16x8xf32> to vector<8x8xf32>
    %cst_50 = arith.constant dense<0.000000e+00> : vector<8x8xf32>
    %168 = tpu.matmul %166, %167, %cst_50 {dimension_numbers = #tpu.dot_dimension_numbers<[1], [0], [0], [1], [0, 0, 1, 1], [], []>} : vector<8x8xf32>, vector<8x8xf32>, vector<8x8xf32> -> vector<8x8xf32>
    %169 = tpu.concatenate %152, %168 in 0 : vector<8x8xf32>, vector<8x8xf32> -> vector<16x8xf32>
    %170 = vector.extract_strided_slice %59 {offsets = [0, 24], sizes = [16, 8], strides = [1, 1]} : vector<16x32xf32> to vector<16x8xf32>
    %171 = vector.extract_strided_slice %60 {offsets = [0, 24], sizes = [16, 8], strides = [1, 1]} : vector<16x32xf32> to vector<16x8xf32>
    %172 = vector.extract_strided_slice %61 {offsets = [0, 24], sizes = [16, 8], strides = [1, 1]} : vector<16x32xf32> to vector<16x8xf32>
    %173 = vector.extract_strided_slice %170 {offsets = [0, 0], sizes = [8, 8], strides = [1, 1]} : vector<16x8xf32> to vector<8x8xf32>
    %174 = vector.extract_strided_slice %171 {offsets = [0, 0], sizes = [8, 8], strides = [1, 1]} : vector<16x8xf32> to vector<8x8xf32>
    %cst_51 = arith.constant dense<0.000000e+00> : vector<8x8xf32>
    %175 = tpu.matmul %173, %174, %cst_51 {dimension_numbers = #tpu.dot_dimension_numbers<[1], [1], [0], [0], [0, 0, 1, 0], [], []>} : vector<8x8xf32>, vector<8x8xf32>, vector<8x8xf32> -> vector<8x8xf32>
    %176 = arith.addf %175, %30 : vector<8x8xf32>
    %cst_52 = arith.constant dense<0xFF800000> : vector<8xf32>
    %177 = vector.multi_reduction <maximumf>, %176, %cst_52 [1] : vector<8x8xf32> to vector<8xf32>
    %178 = vector.shape_cast %177 : vector<8xf32> to vector<8x1xf32>
    %179 = vector.broadcast %178 : vector<8x1xf32> to vector<8x8xf32>
    %180 = arith.subf %176, %179 : vector<8x8xf32>
    %181 = math.exp %180 : vector<8x8xf32>
    %cst_53 = arith.constant dense<0.000000e+00> : vector<8xf32>
    %182 = vector.multi_reduction <add>, %181, %cst_53 [1] : vector<8x8xf32> to vector<8xf32>
    %183 = vector.shape_cast %182 : vector<8xf32> to vector<8x1xf32>
    %184 = tpu.reciprocal %183 {approx = true} : vector<8x1xf32> -> vector<8x1xf32>
    %185 = vector.broadcast %184 : vector<8x1xf32> to vector<8x8xf32>
    %186 = arith.mulf %181, %185 : vector<8x8xf32>
    %187 = vector.extract_strided_slice %172 {offsets = [0, 0], sizes = [8, 8], strides = [1, 1]} : vector<16x8xf32> to vector<8x8xf32>
    %cst_54 = arith.constant dense<0.000000e+00> : vector<8x8xf32>
    %188 = tpu.matmul %186, %187, %cst_54 {dimension_numbers = #tpu.dot_dimension_numbers<[1], [0], [0], [1], [0, 0, 1, 1], [], []>} : vector<8x8xf32>, vector<8x8xf32>, vector<8x8xf32> -> vector<8x8xf32>
    %189 = vector.extract_strided_slice %170 {offsets = [8, 0], sizes = [8, 8], strides = [1, 1]} : vector<16x8xf32> to vector<8x8xf32>
    %190 = vector.extract_strided_slice %171 {offsets = [8, 0], sizes = [8, 8], strides = [1, 1]} : vector<16x8xf32> to vector<8x8xf32>
    %cst_55 = arith.constant dense<0.000000e+00> : vector<8x8xf32>
    %191 = tpu.matmul %189, %190, %cst_55 {dimension_numbers = #tpu.dot_dimension_numbers<[1], [1], [0], [0], [0, 0, 1, 0], [], []>} : vector<8x8xf32>, vector<8x8xf32>, vector<8x8xf32> -> vector<8x8xf32>
    %192 = arith.addf %191, %37 : vector<8x8xf32>
    %cst_56 = arith.constant dense<0xFF800000> : vector<8xf32>
    %193 = vector.multi_reduction <maximumf>, %192, %cst_56 [1] : vector<8x8xf32> to vector<8xf32>
    %194 = vector.shape_cast %193 : vector<8xf32> to vector<8x1xf32>
    %195 = vector.broadcast %194 : vector<8x1xf32> to vector<8x8xf32>
    %196 = arith.subf %192, %195 : vector<8x8xf32>
    %197 = math.exp %196 : vector<8x8xf32>
    %cst_57 = arith.constant dense<0.000000e+00> : vector<8xf32>
    %198 = vector.multi_reduction <add>, %197, %cst_57 [1] : vector<8x8xf32> to vector<8xf32>
    %199 = vector.shape_cast %198 : vector<8xf32> to vector<8x1xf32>
    %200 = tpu.reciprocal %199 {approx = true} : vector<8x1xf32> -> vector<8x1xf32>
    %201 = vector.broadcast %200 : vector<8x1xf32> to vector<8x8xf32>
    %202 = arith.mulf %197, %201 : vector<8x8xf32>
    %203 = vector.extract_strided_slice %172 {offsets = [8, 0], sizes = [8, 8], strides = [1, 1]} : vector<16x8xf32> to vector<8x8xf32>
    %cst_58 = arith.constant dense<0.000000e+00> : vector<8x8xf32>
    %204 = tpu.matmul %202, %203, %cst_58 {dimension_numbers = #tpu.dot_dimension_numbers<[1], [0], [0], [1], [0, 0, 1, 1], [], []>} : vector<8x8xf32>, vector<8x8xf32>, vector<8x8xf32> -> vector<8x8xf32>
    %205 = tpu.concatenate %188, %204 in 0 : vector<8x8xf32>, vector<8x8xf32> -> vector<16x8xf32>
    %206 = tpu.concatenate %97, %133, %169, %205 in 1 : vector<16x8xf32>, vector<16x8xf32>, vector<16x8xf32>, vector<16x8xf32> -> vector<16x32xf32>
    %cst_59 = arith.constant dense<0.000000e+00> : vector<16x32xf32>
    %207 = tpu.matmul %206, %46, %cst_59 {dimension_numbers = #tpu.dot_dimension_numbers<[1], [0], [0], [1], [0, 0, 1, 1], [], []>} : vector<16x32xf32>, vector<32x32xf32>, vector<16x32xf32> -> vector<16x32xf32>
    %208 = vector.broadcast %50 : vector<1x32xf32> to vector<16x32xf32>
    %209 = arith.addf %207, %208 : vector<16x32xf32>
    %210 = arith.addf %209, %23 : vector<16x32xf32>
    %cst_60 = arith.constant dense<0.000000e+00> : vector<16xf32>
    %211 = vector.multi_reduction <add>, %210, %cst_60 [1] : vector<16x32xf32> to vector<16xf32>
    %212 = vector.shape_cast %211 : vector<16xf32> to vector<16x1xf32>
    %cst_61 = arith.constant 3.200000e+01 : f32
    %213 = vector.broadcast %cst_61 : f32 to vector<16x1xf32>
    %214 = arith.divf %212, %213 : vector<16x1xf32>
    %215 = vector.broadcast %214 : vector<16x1xf32> to vector<16x32xf32>
    %216 = arith.subf %210, %215 : vector<16x32xf32>
    %217 = arith.mulf %216, %216 : vector<16x32xf32>
    %cst_62 = arith.constant dense<0.000000e+00> : vector<16xf32>
    %218 = vector.multi_reduction <add>, %217, %cst_62 [1] : vector<16x32xf32> to vector<16xf32>
    %219 = vector.shape_cast %218 : vector<16xf32> to vector<16x1xf32>
    %cst_63 = arith.constant 3.200000e+01 : f32
    %220 = vector.broadcast %cst_63 : f32 to vector<16x1xf32>
    %221 = arith.divf %219, %220 : vector<16x1xf32>
    %cst_64 = arith.constant 9.99999996E-13 : f32
    %222 = vector.broadcast %cst_64 : f32 to vector<16x1xf32>
    %223 = arith.addf %221, %222 : vector<16x1xf32>
    %224 = math.rsqrt %223 : vector<16x1xf32>
    %225 = vector.broadcast %224 : vector<16x1xf32> to vector<16x32xf32>
    %226 = arith.mulf %216, %225 : vector<16x32xf32>
    %227 = vector.broadcast %51 : vector<1x32xf32> to vector<16x32xf32>
    %228 = arith.mulf %226, %227 : vector<16x32xf32>
    %229 = vector.broadcast %52 : vector<1x32xf32> to vector<16x32xf32>
    %230 = arith.addf %228, %229 : vector<16x32xf32>
    %c0_65 = arith.constant 0 : index
    %c0_66 = arith.constant 0 : index
    %c0_67 = arith.constant 0 : index
    %231 = vector.load %arg3[%c0_65, %c0_66, %c0_67] : memref<2x32x64xf32, #tpu.memory_space<vmem>>, vector<1x32x64xf32>
    %232 = vector.shape_cast %231 : vector<1x32x64xf32> to vector<32x64xf32>
    %cst_68 = arith.constant dense<0.000000e+00> : vector<16x64xf32>
    %233 = tpu.matmul %230, %232, %cst_68 {dimension_numbers = #tpu.dot_dimension_numbers<[1], [0], [0], [1], [0, 0, 1, 1], [], []>} : vector<16x32xf32>, vector<32x64xf32>, vector<16x64xf32> -> vector<16x64xf32>
    %234 = vector.broadcast %43 : vector<1x64xf32> to vector<16x64xf32>
    %235 = arith.addf %233, %234 : vector<16x64xf32>
    %cst_69 = arith.constant 5.000000e-01 : f32
    %236 = vector.broadcast %cst_69 : f32 to vector<16x64xf32>
    %237 = arith.mulf %236, %235 : vector<16x64xf32>
    %cst_70 = arith.constant 4.471500e-02 : f32
    %238 = vector.broadcast %cst_70 : f32 to vector<16x64xf32>
    %239 = arith.mulf %238, %235 : vector<16x64xf32>
    %240 = arith.mulf %239, %235 : vector<16x64xf32>
    %241 = arith.mulf %240, %235 : vector<16x64xf32>
    %242 = arith.addf %235, %241 : vector<16x64xf32>
    %cst_71 = arith.constant 0.797884583 : f32
    %243 = vector.broadcast %cst_71 : f32 to vector<16x64xf32>
    %244 = arith.mulf %243, %242 : vector<16x64xf32>
    %245 = math.tanh %244 : vector<16x64xf32>
    %cst_72 = arith.constant 1.000000e+00 : f32
    %246 = vector.broadcast %cst_72 : f32 to vector<16x64xf32>
    %247 = arith.addf %246, %245 : vector<16x64xf32>
    %248 = arith.mulf %237, %247 : vector<16x64xf32>
    %cst_73 = arith.constant dense<0.000000e+00> : vector<16x32xf32>
    %249 = tpu.matmul %248, %47, %cst_73 {dimension_numbers = #tpu.dot_dimension_numbers<[1], [0], [0], [1], [0, 0, 1, 1], [], []>} : vector<16x64xf32>, vector<64x32xf32>, vector<16x32xf32> -> vector<16x32xf32>
    %250 = vector.broadcast %53 : vector<1x32xf32> to vector<16x32xf32>
    %251 = arith.addf %249, %250 : vector<16x32xf32>
    %252 = arith.addf %251, %230 : vector<16x32xf32>
    %cst_74 = arith.constant dense<0.000000e+00> : vector<16xf32>
    %253 = vector.multi_reduction <add>, %252, %cst_74 [1] : vector<16x32xf32> to vector<16xf32>
    %254 = vector.shape_cast %253 : vector<16xf32> to vector<16x1xf32>
    %cst_75 = arith.constant 3.200000e+01 : f32
    %255 = vector.broadcast %cst_75 : f32 to vector<16x1xf32>
    %256 = arith.divf %254, %255 : vector<16x1xf32>
    %257 = vector.broadcast %256 : vector<16x1xf32> to vector<16x32xf32>
    %258 = arith.subf %252, %257 : vector<16x32xf32>
    %259 = arith.mulf %258, %258 : vector<16x32xf32>
    %cst_76 = arith.constant dense<0.000000e+00> : vector<16xf32>
    %260 = vector.multi_reduction <add>, %259, %cst_76 [1] : vector<16x32xf32> to vector<16xf32>
    %261 = vector.shape_cast %260 : vector<16xf32> to vector<16x1xf32>
    %cst_77 = arith.constant 3.200000e+01 : f32
    %262 = vector.broadcast %cst_77 : f32 to vector<16x1xf32>
    %263 = arith.divf %261, %262 : vector<16x1xf32>
    %cst_78 = arith.constant 9.99999996E-13 : f32
    %264 = vector.broadcast %cst_78 : f32 to vector<16x1xf32>
    %265 = arith.addf %263, %264 : vector<16x1xf32>
    %266 = math.rsqrt %265 : vector<16x1xf32>
    %267 = vector.broadcast %266 : vector<16x1xf32> to vector<16x32xf32>
    %268 = arith.mulf %258, %267 : vector<16x32xf32>
    %269 = vector.broadcast %54 : vector<1x32xf32> to vector<16x32xf32>
    %270 = arith.mulf %268, %269 : vector<16x32xf32>
    %271 = vector.broadcast %55 : vector<1x32xf32> to vector<16x32xf32>
    %272 = arith.addf %270, %271 : vector<16x32xf32>
    %c1_79 = arith.constant 1 : index
    %c0_80 = arith.constant 0 : index
    %c0_81 = arith.constant 0 : index
    %273 = vector.load %arg2[%c1_79, %c0_80, %c0_81] : memref<2x32x96xf32, #tpu.memory_space<vmem>>, vector<1x32x96xf32>
    %274 = vector.shape_cast %273 : vector<1x32x96xf32> to vector<32x96xf32>
    %c1_82 = arith.constant 1 : index
    %c0_83 = arith.constant 0 : index
    %c0_84 = arith.constant 0 : index
    %275 = vector.load %arg6[%c1_82, %c0_83, %c0_84] : memref<2x2x96xf32, #tpu.memory_space<vmem>>, vector<1x2x96xf32>
    %276 = vector.shape_cast %275 : vector<1x2x96xf32> to vector<2x96xf32>
    %277 = vector.extract_strided_slice %276 {offsets = [0, 0], sizes = [1, 96], strides = [1, 1]} : vector<2x96xf32> to vector<1x96xf32>
    %278 = vector.extract_strided_slice %276 {offsets = [1, 0], sizes = [1, 64], strides = [1, 1]} : vector<2x96xf32> to vector<1x64xf32>
    %c1_85 = arith.constant 1 : index
    %c0_86 = arith.constant 0 : index
    %c0_87 = arith.constant 0 : index
    %279 = vector.load %arg4[%c1_85, %c0_86, %c0_87] : memref<2x96x32xf32, #tpu.memory_space<vmem>>, vector<1x96x32xf32>
    %280 = vector.shape_cast %279 : vector<1x96x32xf32> to vector<96x32xf32>
    %281 = vector.extract_strided_slice %280 {offsets = [0, 0], sizes = [32, 32], strides = [1, 1]} : vector<96x32xf32> to vector<32x32xf32>
    %282 = vector.extract_strided_slice %280 {offsets = [32, 0], sizes = [64, 32], strides = [1, 1]} : vector<96x32xf32> to vector<64x32xf32>
    %c1_88 = arith.constant 1 : index
    %c0_89 = arith.constant 0 : index
    %c0_90 = arith.constant 0 : index
    %283 = vector.load %arg5[%c1_88, %c0_89, %c0_90] : memref<2x6x32xf32, #tpu.memory_space<vmem>>, vector<1x6x32xf32>
    %284 = vector.shape_cast %283 : vector<1x6x32xf32> to vector<6x32xf32>
    %285 = vector.extract_strided_slice %284 {offsets = [0, 0], sizes = [1, 32], strides = [1, 1]} : vector<6x32xf32> to vector<1x32xf32>
    %286 = vector.extract_strided_slice %284 {offsets = [1, 0], sizes = [1, 32], strides = [1, 1]} : vector<6x32xf32> to vector<1x32xf32>
    %287 = vector.extract_strided_slice %284 {offsets = [2, 0], sizes = [1, 32], strides = [1, 1]} : vector<6x32xf32> to vector<1x32xf32>
    %288 = vector.extract_strided_slice %284 {offsets = [3, 0], sizes = [1, 32], strides = [1, 1]} : vector<6x32xf32> to vector<1x32xf32>
    %289 = vector.extract_strided_slice %284 {offsets = [4, 0], sizes = [1, 32], strides = [1, 1]} : vector<6x32xf32> to vector<1x32xf32>
    %290 = vector.extract_strided_slice %284 {offsets = [5, 0], sizes = [1, 32], strides = [1, 1]} : vector<6x32xf32> to vector<1x32xf32>
    %cst_91 = arith.constant dense<0.000000e+00> : vector<16x96xf32>
    %291 = tpu.matmul %272, %274, %cst_91 {dimension_numbers = #tpu.dot_dimension_numbers<[1], [0], [0], [1], [0, 0, 1, 1], [], []>} : vector<16x32xf32>, vector<32x96xf32>, vector<16x96xf32> -> vector<16x96xf32>
    %292 = vector.broadcast %277 : vector<1x96xf32> to vector<16x96xf32>
    %293 = arith.addf %291, %292 : vector<16x96xf32>
    %294 = vector.extract_strided_slice %293 {offsets = [0, 0], sizes = [16, 32], strides = [1, 1]} : vector<16x96xf32> to vector<16x32xf32>
    %295 = vector.extract_strided_slice %293 {offsets = [0, 32], sizes = [16, 32], strides = [1, 1]} : vector<16x96xf32> to vector<16x32xf32>
    %296 = vector.extract_strided_slice %293 {offsets = [0, 64], sizes = [16, 32], strides = [1, 1]} : vector<16x96xf32> to vector<16x32xf32>
    %297 = vector.extract_strided_slice %294 {offsets = [0, 0], sizes = [16, 8], strides = [1, 1]} : vector<16x32xf32> to vector<16x8xf32>
    %298 = vector.extract_strided_slice %295 {offsets = [0, 0], sizes = [16, 8], strides = [1, 1]} : vector<16x32xf32> to vector<16x8xf32>
    %299 = vector.extract_strided_slice %296 {offsets = [0, 0], sizes = [16, 8], strides = [1, 1]} : vector<16x32xf32> to vector<16x8xf32>
    %300 = vector.extract_strided_slice %297 {offsets = [0, 0], sizes = [8, 8], strides = [1, 1]} : vector<16x8xf32> to vector<8x8xf32>
    %301 = vector.extract_strided_slice %298 {offsets = [0, 0], sizes = [8, 8], strides = [1, 1]} : vector<16x8xf32> to vector<8x8xf32>
    %cst_92 = arith.constant dense<0.000000e+00> : vector<8x8xf32>
    %302 = tpu.matmul %300, %301, %cst_92 {dimension_numbers = #tpu.dot_dimension_numbers<[1], [1], [0], [0], [0, 0, 1, 0], [], []>} : vector<8x8xf32>, vector<8x8xf32>, vector<8x8xf32> -> vector<8x8xf32>
    %303 = arith.addf %302, %30 : vector<8x8xf32>
    %cst_93 = arith.constant dense<0xFF800000> : vector<8xf32>
    %304 = vector.multi_reduction <maximumf>, %303, %cst_93 [1] : vector<8x8xf32> to vector<8xf32>
    %305 = vector.shape_cast %304 : vector<8xf32> to vector<8x1xf32>
    %306 = vector.broadcast %305 : vector<8x1xf32> to vector<8x8xf32>
    %307 = arith.subf %303, %306 : vector<8x8xf32>
    %308 = math.exp %307 : vector<8x8xf32>
    %cst_94 = arith.constant dense<0.000000e+00> : vector<8xf32>
    %309 = vector.multi_reduction <add>, %308, %cst_94 [1] : vector<8x8xf32> to vector<8xf32>
    %310 = vector.shape_cast %309 : vector<8xf32> to vector<8x1xf32>
    %311 = tpu.reciprocal %310 {approx = true} : vector<8x1xf32> -> vector<8x1xf32>
    %312 = vector.broadcast %311 : vector<8x1xf32> to vector<8x8xf32>
    %313 = arith.mulf %308, %312 : vector<8x8xf32>
    %314 = vector.extract_strided_slice %299 {offsets = [0, 0], sizes = [8, 8], strides = [1, 1]} : vector<16x8xf32> to vector<8x8xf32>
    %cst_95 = arith.constant dense<0.000000e+00> : vector<8x8xf32>
    %315 = tpu.matmul %313, %314, %cst_95 {dimension_numbers = #tpu.dot_dimension_numbers<[1], [0], [0], [1], [0, 0, 1, 1], [], []>} : vector<8x8xf32>, vector<8x8xf32>, vector<8x8xf32> -> vector<8x8xf32>
    %316 = vector.extract_strided_slice %297 {offsets = [8, 0], sizes = [8, 8], strides = [1, 1]} : vector<16x8xf32> to vector<8x8xf32>
    %317 = vector.extract_strided_slice %298 {offsets = [8, 0], sizes = [8, 8], strides = [1, 1]} : vector<16x8xf32> to vector<8x8xf32>
    %cst_96 = arith.constant dense<0.000000e+00> : vector<8x8xf32>
    %318 = tpu.matmul %316, %317, %cst_96 {dimension_numbers = #tpu.dot_dimension_numbers<[1], [1], [0], [0], [0, 0, 1, 0], [], []>} : vector<8x8xf32>, vector<8x8xf32>, vector<8x8xf32> -> vector<8x8xf32>
    %319 = arith.addf %318, %37 : vector<8x8xf32>
    %cst_97 = arith.constant dense<0xFF800000> : vector<8xf32>
    %320 = vector.multi_reduction <maximumf>, %319, %cst_97 [1] : vector<8x8xf32> to vector<8xf32>
    %321 = vector.shape_cast %320 : vector<8xf32> to vector<8x1xf32>
    %322 = vector.broadcast %321 : vector<8x1xf32> to vector<8x8xf32>
    %323 = arith.subf %319, %322 : vector<8x8xf32>
    %324 = math.exp %323 : vector<8x8xf32>
    %cst_98 = arith.constant dense<0.000000e+00> : vector<8xf32>
    %325 = vector.multi_reduction <add>, %324, %cst_98 [1] : vector<8x8xf32> to vector<8xf32>
    %326 = vector.shape_cast %325 : vector<8xf32> to vector<8x1xf32>
    %327 = tpu.reciprocal %326 {approx = true} : vector<8x1xf32> -> vector<8x1xf32>
    %328 = vector.broadcast %327 : vector<8x1xf32> to vector<8x8xf32>
    %329 = arith.mulf %324, %328 : vector<8x8xf32>
    %330 = vector.extract_strided_slice %299 {offsets = [8, 0], sizes = [8, 8], strides = [1, 1]} : vector<16x8xf32> to vector<8x8xf32>
    %cst_99 = arith.constant dense<0.000000e+00> : vector<8x8xf32>
    %331 = tpu.matmul %329, %330, %cst_99 {dimension_numbers = #tpu.dot_dimension_numbers<[1], [0], [0], [1], [0, 0, 1, 1], [], []>} : vector<8x8xf32>, vector<8x8xf32>, vector<8x8xf32> -> vector<8x8xf32>
    %332 = tpu.concatenate %315, %331 in 0 : vector<8x8xf32>, vector<8x8xf32> -> vector<16x8xf32>
    %333 = vector.extract_strided_slice %294 {offsets = [0, 8], sizes = [16, 8], strides = [1, 1]} : vector<16x32xf32> to vector<16x8xf32>
    %334 = vector.extract_strided_slice %295 {offsets = [0, 8], sizes = [16, 8], strides = [1, 1]} : vector<16x32xf32> to vector<16x8xf32>
    %335 = vector.extract_strided_slice %296 {offsets = [0, 8], sizes = [16, 8], strides = [1, 1]} : vector<16x32xf32> to vector<16x8xf32>
    %336 = vector.extract_strided_slice %333 {offsets = [0, 0], sizes = [8, 8], strides = [1, 1]} : vector<16x8xf32> to vector<8x8xf32>
    %337 = vector.extract_strided_slice %334 {offsets = [0, 0], sizes = [8, 8], strides = [1, 1]} : vector<16x8xf32> to vector<8x8xf32>
    %cst_100 = arith.constant dense<0.000000e+00> : vector<8x8xf32>
    %338 = tpu.matmul %336, %337, %cst_100 {dimension_numbers = #tpu.dot_dimension_numbers<[1], [1], [0], [0], [0, 0, 1, 0], [], []>} : vector<8x8xf32>, vector<8x8xf32>, vector<8x8xf32> -> vector<8x8xf32>
    %339 = arith.addf %338, %30 : vector<8x8xf32>
    %cst_101 = arith.constant dense<0xFF800000> : vector<8xf32>
    %340 = vector.multi_reduction <maximumf>, %339, %cst_101 [1] : vector<8x8xf32> to vector<8xf32>
    %341 = vector.shape_cast %340 : vector<8xf32> to vector<8x1xf32>
    %342 = vector.broadcast %341 : vector<8x1xf32> to vector<8x8xf32>
    %343 = arith.subf %339, %342 : vector<8x8xf32>
    %344 = math.exp %343 : vector<8x8xf32>
    %cst_102 = arith.constant dense<0.000000e+00> : vector<8xf32>
    %345 = vector.multi_reduction <add>, %344, %cst_102 [1] : vector<8x8xf32> to vector<8xf32>
    %346 = vector.shape_cast %345 : vector<8xf32> to vector<8x1xf32>
    %347 = tpu.reciprocal %346 {approx = true} : vector<8x1xf32> -> vector<8x1xf32>
    %348 = vector.broadcast %347 : vector<8x1xf32> to vector<8x8xf32>
    %349 = arith.mulf %344, %348 : vector<8x8xf32>
    %350 = vector.extract_strided_slice %335 {offsets = [0, 0], sizes = [8, 8], strides = [1, 1]} : vector<16x8xf32> to vector<8x8xf32>
    %cst_103 = arith.constant dense<0.000000e+00> : vector<8x8xf32>
    %351 = tpu.matmul %349, %350, %cst_103 {dimension_numbers = #tpu.dot_dimension_numbers<[1], [0], [0], [1], [0, 0, 1, 1], [], []>} : vector<8x8xf32>, vector<8x8xf32>, vector<8x8xf32> -> vector<8x8xf32>
    %352 = vector.extract_strided_slice %333 {offsets = [8, 0], sizes = [8, 8], strides = [1, 1]} : vector<16x8xf32> to vector<8x8xf32>
    %353 = vector.extract_strided_slice %334 {offsets = [8, 0], sizes = [8, 8], strides = [1, 1]} : vector<16x8xf32> to vector<8x8xf32>
    %cst_104 = arith.constant dense<0.000000e+00> : vector<8x8xf32>
    %354 = tpu.matmul %352, %353, %cst_104 {dimension_numbers = #tpu.dot_dimension_numbers<[1], [1], [0], [0], [0, 0, 1, 0], [], []>} : vector<8x8xf32>, vector<8x8xf32>, vector<8x8xf32> -> vector<8x8xf32>
    %355 = arith.addf %354, %37 : vector<8x8xf32>
    %cst_105 = arith.constant dense<0xFF800000> : vector<8xf32>
    %356 = vector.multi_reduction <maximumf>, %355, %cst_105 [1] : vector<8x8xf32> to vector<8xf32>
    %357 = vector.shape_cast %356 : vector<8xf32> to vector<8x1xf32>
    %358 = vector.broadcast %357 : vector<8x1xf32> to vector<8x8xf32>
    %359 = arith.subf %355, %358 : vector<8x8xf32>
    %360 = math.exp %359 : vector<8x8xf32>
    %cst_106 = arith.constant dense<0.000000e+00> : vector<8xf32>
    %361 = vector.multi_reduction <add>, %360, %cst_106 [1] : vector<8x8xf32> to vector<8xf32>
    %362 = vector.shape_cast %361 : vector<8xf32> to vector<8x1xf32>
    %363 = tpu.reciprocal %362 {approx = true} : vector<8x1xf32> -> vector<8x1xf32>
    %364 = vector.broadcast %363 : vector<8x1xf32> to vector<8x8xf32>
    %365 = arith.mulf %360, %364 : vector<8x8xf32>
    %366 = vector.extract_strided_slice %335 {offsets = [8, 0], sizes = [8, 8], strides = [1, 1]} : vector<16x8xf32> to vector<8x8xf32>
    %cst_107 = arith.constant dense<0.000000e+00> : vector<8x8xf32>
    %367 = tpu.matmul %365, %366, %cst_107 {dimension_numbers = #tpu.dot_dimension_numbers<[1], [0], [0], [1], [0, 0, 1, 1], [], []>} : vector<8x8xf32>, vector<8x8xf32>, vector<8x8xf32> -> vector<8x8xf32>
    %368 = tpu.concatenate %351, %367 in 0 : vector<8x8xf32>, vector<8x8xf32> -> vector<16x8xf32>
    %369 = vector.extract_strided_slice %294 {offsets = [0, 16], sizes = [16, 8], strides = [1, 1]} : vector<16x32xf32> to vector<16x8xf32>
    %370 = vector.extract_strided_slice %295 {offsets = [0, 16], sizes = [16, 8], strides = [1, 1]} : vector<16x32xf32> to vector<16x8xf32>
    %371 = vector.extract_strided_slice %296 {offsets = [0, 16], sizes = [16, 8], strides = [1, 1]} : vector<16x32xf32> to vector<16x8xf32>
    %372 = vector.extract_strided_slice %369 {offsets = [0, 0], sizes = [8, 8], strides = [1, 1]} : vector<16x8xf32> to vector<8x8xf32>
    %373 = vector.extract_strided_slice %370 {offsets = [0, 0], sizes = [8, 8], strides = [1, 1]} : vector<16x8xf32> to vector<8x8xf32>
    %cst_108 = arith.constant dense<0.000000e+00> : vector<8x8xf32>
    %374 = tpu.matmul %372, %373, %cst_108 {dimension_numbers = #tpu.dot_dimension_numbers<[1], [1], [0], [0], [0, 0, 1, 0], [], []>} : vector<8x8xf32>, vector<8x8xf32>, vector<8x8xf32> -> vector<8x8xf32>
    %375 = arith.addf %374, %30 : vector<8x8xf32>
    %cst_109 = arith.constant dense<0xFF800000> : vector<8xf32>
    %376 = vector.multi_reduction <maximumf>, %375, %cst_109 [1] : vector<8x8xf32> to vector<8xf32>
    %377 = vector.shape_cast %376 : vector<8xf32> to vector<8x1xf32>
    %378 = vector.broadcast %377 : vector<8x1xf32> to vector<8x8xf32>
    %379 = arith.subf %375, %378 : vector<8x8xf32>
    %380 = math.exp %379 : vector<8x8xf32>
    %cst_110 = arith.constant dense<0.000000e+00> : vector<8xf32>
    %381 = vector.multi_reduction <add>, %380, %cst_110 [1] : vector<8x8xf32> to vector<8xf32>
    %382 = vector.shape_cast %381 : vector<8xf32> to vector<8x1xf32>
    %383 = tpu.reciprocal %382 {approx = true} : vector<8x1xf32> -> vector<8x1xf32>
    %384 = vector.broadcast %383 : vector<8x1xf32> to vector<8x8xf32>
    %385 = arith.mulf %380, %384 : vector<8x8xf32>
    %386 = vector.extract_strided_slice %371 {offsets = [0, 0], sizes = [8, 8], strides = [1, 1]} : vector<16x8xf32> to vector<8x8xf32>
    %cst_111 = arith.constant dense<0.000000e+00> : vector<8x8xf32>
    %387 = tpu.matmul %385, %386, %cst_111 {dimension_numbers = #tpu.dot_dimension_numbers<[1], [0], [0], [1], [0, 0, 1, 1], [], []>} : vector<8x8xf32>, vector<8x8xf32>, vector<8x8xf32> -> vector<8x8xf32>
    %388 = vector.extract_strided_slice %369 {offsets = [8, 0], sizes = [8, 8], strides = [1, 1]} : vector<16x8xf32> to vector<8x8xf32>
    %389 = vector.extract_strided_slice %370 {offsets = [8, 0], sizes = [8, 8], strides = [1, 1]} : vector<16x8xf32> to vector<8x8xf32>
    %cst_112 = arith.constant dense<0.000000e+00> : vector<8x8xf32>
    %390 = tpu.matmul %388, %389, %cst_112 {dimension_numbers = #tpu.dot_dimension_numbers<[1], [1], [0], [0], [0, 0, 1, 0], [], []>} : vector<8x8xf32>, vector<8x8xf32>, vector<8x8xf32> -> vector<8x8xf32>
    %391 = arith.addf %390, %37 : vector<8x8xf32>
    %cst_113 = arith.constant dense<0xFF800000> : vector<8xf32>
    %392 = vector.multi_reduction <maximumf>, %391, %cst_113 [1] : vector<8x8xf32> to vector<8xf32>
    %393 = vector.shape_cast %392 : vector<8xf32> to vector<8x1xf32>
    %394 = vector.broadcast %393 : vector<8x1xf32> to vector<8x8xf32>
    %395 = arith.subf %391, %394 : vector<8x8xf32>
    %396 = math.exp %395 : vector<8x8xf32>
    %cst_114 = arith.constant dense<0.000000e+00> : vector<8xf32>
    %397 = vector.multi_reduction <add>, %396, %cst_114 [1] : vector<8x8xf32> to vector<8xf32>
    %398 = vector.shape_cast %397 : vector<8xf32> to vector<8x1xf32>
    %399 = tpu.reciprocal %398 {approx = true} : vector<8x1xf32> -> vector<8x1xf32>
    %400 = vector.broadcast %399 : vector<8x1xf32> to vector<8x8xf32>
    %401 = arith.mulf %396, %400 : vector<8x8xf32>
    %402 = vector.extract_strided_slice %371 {offsets = [8, 0], sizes = [8, 8], strides = [1, 1]} : vector<16x8xf32> to vector<8x8xf32>
    %cst_115 = arith.constant dense<0.000000e+00> : vector<8x8xf32>
    %403 = tpu.matmul %401, %402, %cst_115 {dimension_numbers = #tpu.dot_dimension_numbers<[1], [0], [0], [1], [0, 0, 1, 1], [], []>} : vector<8x8xf32>, vector<8x8xf32>, vector<8x8xf32> -> vector<8x8xf32>
    %404 = tpu.concatenate %387, %403 in 0 : vector<8x8xf32>, vector<8x8xf32> -> vector<16x8xf32>
    %405 = vector.extract_strided_slice %294 {offsets = [0, 24], sizes = [16, 8], strides = [1, 1]} : vector<16x32xf32> to vector<16x8xf32>
    %406 = vector.extract_strided_slice %295 {offsets = [0, 24], sizes = [16, 8], strides = [1, 1]} : vector<16x32xf32> to vector<16x8xf32>
    %407 = vector.extract_strided_slice %296 {offsets = [0, 24], sizes = [16, 8], strides = [1, 1]} : vector<16x32xf32> to vector<16x8xf32>
    %408 = vector.extract_strided_slice %405 {offsets = [0, 0], sizes = [8, 8], strides = [1, 1]} : vector<16x8xf32> to vector<8x8xf32>
    %409 = vector.extract_strided_slice %406 {offsets = [0, 0], sizes = [8, 8], strides = [1, 1]} : vector<16x8xf32> to vector<8x8xf32>
    %cst_116 = arith.constant dense<0.000000e+00> : vector<8x8xf32>
    %410 = tpu.matmul %408, %409, %cst_116 {dimension_numbers = #tpu.dot_dimension_numbers<[1], [1], [0], [0], [0, 0, 1, 0], [], []>} : vector<8x8xf32>, vector<8x8xf32>, vector<8x8xf32> -> vector<8x8xf32>
    %411 = arith.addf %410, %30 : vector<8x8xf32>
    %cst_117 = arith.constant dense<0xFF800000> : vector<8xf32>
    %412 = vector.multi_reduction <maximumf>, %411, %cst_117 [1] : vector<8x8xf32> to vector<8xf32>
    %413 = vector.shape_cast %412 : vector<8xf32> to vector<8x1xf32>
    %414 = vector.broadcast %413 : vector<8x1xf32> to vector<8x8xf32>
    %415 = arith.subf %411, %414 : vector<8x8xf32>
    %416 = math.exp %415 : vector<8x8xf32>
    %cst_118 = arith.constant dense<0.000000e+00> : vector<8xf32>
    %417 = vector.multi_reduction <add>, %416, %cst_118 [1] : vector<8x8xf32> to vector<8xf32>
    %418 = vector.shape_cast %417 : vector<8xf32> to vector<8x1xf32>
    %419 = tpu.reciprocal %418 {approx = true} : vector<8x1xf32> -> vector<8x1xf32>
    %420 = vector.broadcast %419 : vector<8x1xf32> to vector<8x8xf32>
    %421 = arith.mulf %416, %420 : vector<8x8xf32>
    %422 = vector.extract_strided_slice %407 {offsets = [0, 0], sizes = [8, 8], strides = [1, 1]} : vector<16x8xf32> to vector<8x8xf32>
    %cst_119 = arith.constant dense<0.000000e+00> : vector<8x8xf32>
    %423 = tpu.matmul %421, %422, %cst_119 {dimension_numbers = #tpu.dot_dimension_numbers<[1], [0], [0], [1], [0, 0, 1, 1], [], []>} : vector<8x8xf32>, vector<8x8xf32>, vector<8x8xf32> -> vector<8x8xf32>
    %424 = vector.extract_strided_slice %405 {offsets = [8, 0], sizes = [8, 8], strides = [1, 1]} : vector<16x8xf32> to vector<8x8xf32>
    %425 = vector.extract_strided_slice %406 {offsets = [8, 0], sizes = [8, 8], strides = [1, 1]} : vector<16x8xf32> to vector<8x8xf32>
    %cst_120 = arith.constant dense<0.000000e+00> : vector<8x8xf32>
    %426 = tpu.matmul %424, %425, %cst_120 {dimension_numbers = #tpu.dot_dimension_numbers<[1], [1], [0], [0], [0, 0, 1, 0], [], []>} : vector<8x8xf32>, vector<8x8xf32>, vector<8x8xf32> -> vector<8x8xf32>
    %427 = arith.addf %426, %37 : vector<8x8xf32>
    %cst_121 = arith.constant dense<0xFF800000> : vector<8xf32>
    %428 = vector.multi_reduction <maximumf>, %427, %cst_121 [1] : vector<8x8xf32> to vector<8xf32>
    %429 = vector.shape_cast %428 : vector<8xf32> to vector<8x1xf32>
    %430 = vector.broadcast %429 : vector<8x1xf32> to vector<8x8xf32>
    %431 = arith.subf %427, %430 : vector<8x8xf32>
    %432 = math.exp %431 : vector<8x8xf32>
    %cst_122 = arith.constant dense<0.000000e+00> : vector<8xf32>
    %433 = vector.multi_reduction <add>, %432, %cst_122 [1] : vector<8x8xf32> to vector<8xf32>
    %434 = vector.shape_cast %433 : vector<8xf32> to vector<8x1xf32>
    %435 = tpu.reciprocal %434 {approx = true} : vector<8x1xf32> -> vector<8x1xf32>
    %436 = vector.broadcast %435 : vector<8x1xf32> to vector<8x8xf32>
    %437 = arith.mulf %432, %436 : vector<8x8xf32>
    %438 = vector.extract_strided_slice %407 {offsets = [8, 0], sizes = [8, 8], strides = [1, 1]} : vector<16x8xf32> to vector<8x8xf32>
    %cst_123 = arith.constant dense<0.000000e+00> : vector<8x8xf32>
    %439 = tpu.matmul %437, %438, %cst_123 {dimension_numbers = #tpu.dot_dimension_numbers<[1], [0], [0], [1], [0, 0, 1, 1], [], []>} : vector<8x8xf32>, vector<8x8xf32>, vector<8x8xf32> -> vector<8x8xf32>
    %440 = tpu.concatenate %423, %439 in 0 : vector<8x8xf32>, vector<8x8xf32> -> vector<16x8xf32>
    %441 = tpu.concatenate %332, %368, %404, %440 in 1 : vector<16x8xf32>, vector<16x8xf32>, vector<16x8xf32>, vector<16x8xf32> -> vector<16x32xf32>
    %cst_124 = arith.constant dense<0.000000e+00> : vector<16x32xf32>
    %442 = tpu.matmul %441, %281, %cst_124 {dimension_numbers = #tpu.dot_dimension_numbers<[1], [0], [0], [1], [0, 0, 1, 1], [], []>} : vector<16x32xf32>, vector<32x32xf32>, vector<16x32xf32> -> vector<16x32xf32>
    %443 = vector.broadcast %285 : vector<1x32xf32> to vector<16x32xf32>
    %444 = arith.addf %442, %443 : vector<16x32xf32>
    %445 = arith.addf %444, %272 : vector<16x32xf32>
    %cst_125 = arith.constant dense<0.000000e+00> : vector<16xf32>
    %446 = vector.multi_reduction <add>, %445, %cst_125 [1] : vector<16x32xf32> to vector<16xf32>
    %447 = vector.shape_cast %446 : vector<16xf32> to vector<16x1xf32>
    %cst_126 = arith.constant 3.200000e+01 : f32
    %448 = vector.broadcast %cst_126 : f32 to vector<16x1xf32>
    %449 = arith.divf %447, %448 : vector<16x1xf32>
    %450 = vector.broadcast %449 : vector<16x1xf32> to vector<16x32xf32>
    %451 = arith.subf %445, %450 : vector<16x32xf32>
    %452 = arith.mulf %451, %451 : vector<16x32xf32>
    %cst_127 = arith.constant dense<0.000000e+00> : vector<16xf32>
    %453 = vector.multi_reduction <add>, %452, %cst_127 [1] : vector<16x32xf32> to vector<16xf32>
    %454 = vector.shape_cast %453 : vector<16xf32> to vector<16x1xf32>
    %cst_128 = arith.constant 3.200000e+01 : f32
    %455 = vector.broadcast %cst_128 : f32 to vector<16x1xf32>
    %456 = arith.divf %454, %455 : vector<16x1xf32>
    %cst_129 = arith.constant 9.99999996E-13 : f32
    %457 = vector.broadcast %cst_129 : f32 to vector<16x1xf32>
    %458 = arith.addf %456, %457 : vector<16x1xf32>
    %459 = math.rsqrt %458 : vector<16x1xf32>
    %460 = vector.broadcast %459 : vector<16x1xf32> to vector<16x32xf32>
    %461 = arith.mulf %451, %460 : vector<16x32xf32>
    %462 = vector.broadcast %286 : vector<1x32xf32> to vector<16x32xf32>
    %463 = arith.mulf %461, %462 : vector<16x32xf32>
    %464 = vector.broadcast %287 : vector<1x32xf32> to vector<16x32xf32>
    %465 = arith.addf %463, %464 : vector<16x32xf32>
    %c1_130 = arith.constant 1 : index
    %c0_131 = arith.constant 0 : index
    %c0_132 = arith.constant 0 : index
    %466 = vector.load %arg3[%c1_130, %c0_131, %c0_132] : memref<2x32x64xf32, #tpu.memory_space<vmem>>, vector<1x32x64xf32>
    %467 = vector.shape_cast %466 : vector<1x32x64xf32> to vector<32x64xf32>
    %cst_133 = arith.constant dense<0.000000e+00> : vector<16x64xf32>
    %468 = tpu.matmul %465, %467, %cst_133 {dimension_numbers = #tpu.dot_dimension_numbers<[1], [0], [0], [1], [0, 0, 1, 1], [], []>} : vector<16x32xf32>, vector<32x64xf32>, vector<16x64xf32> -> vector<16x64xf32>
    %469 = vector.broadcast %278 : vector<1x64xf32> to vector<16x64xf32>
    %470 = arith.addf %468, %469 : vector<16x64xf32>
    %cst_134 = arith.constant 5.000000e-01 : f32
    %471 = vector.broadcast %cst_134 : f32 to vector<16x64xf32>
    %472 = arith.mulf %471, %470 : vector<16x64xf32>
    %cst_135 = arith.constant 4.471500e-02 : f32
    %473 = vector.broadcast %cst_135 : f32 to vector<16x64xf32>
    %474 = arith.mulf %473, %470 : vector<16x64xf32>
    %475 = arith.mulf %474, %470 : vector<16x64xf32>
    %476 = arith.mulf %475, %470 : vector<16x64xf32>
    %477 = arith.addf %470, %476 : vector<16x64xf32>
    %cst_136 = arith.constant 0.797884583 : f32
    %478 = vector.broadcast %cst_136 : f32 to vector<16x64xf32>
    %479 = arith.mulf %478, %477 : vector<16x64xf32>
    %480 = math.tanh %479 : vector<16x64xf32>
    %cst_137 = arith.constant 1.000000e+00 : f32
    %481 = vector.broadcast %cst_137 : f32 to vector<16x64xf32>
    %482 = arith.addf %481, %480 : vector<16x64xf32>
    %483 = arith.mulf %472, %482 : vector<16x64xf32>
    %cst_138 = arith.constant dense<0.000000e+00> : vector<16x32xf32>
    %484 = tpu.matmul %483, %282, %cst_138 {dimension_numbers = #tpu.dot_dimension_numbers<[1], [0], [0], [1], [0, 0, 1, 1], [], []>} : vector<16x64xf32>, vector<64x32xf32>, vector<16x32xf32> -> vector<16x32xf32>
    %485 = vector.broadcast %288 : vector<1x32xf32> to vector<16x32xf32>
    %486 = arith.addf %484, %485 : vector<16x32xf32>
    %487 = arith.addf %486, %465 : vector<16x32xf32>
    %cst_139 = arith.constant dense<0.000000e+00> : vector<16xf32>
    %488 = vector.multi_reduction <add>, %487, %cst_139 [1] : vector<16x32xf32> to vector<16xf32>
    %489 = vector.shape_cast %488 : vector<16xf32> to vector<16x1xf32>
    %cst_140 = arith.constant 3.200000e+01 : f32
    %490 = vector.broadcast %cst_140 : f32 to vector<16x1xf32>
    %491 = arith.divf %489, %490 : vector<16x1xf32>
    %492 = vector.broadcast %491 : vector<16x1xf32> to vector<16x32xf32>
    %493 = arith.subf %487, %492 : vector<16x32xf32>
    %494 = arith.mulf %493, %493 : vector<16x32xf32>
    %cst_141 = arith.constant dense<0.000000e+00> : vector<16xf32>
    %495 = vector.multi_reduction <add>, %494, %cst_141 [1] : vector<16x32xf32> to vector<16xf32>
    %496 = vector.shape_cast %495 : vector<16xf32> to vector<16x1xf32>
    %cst_142 = arith.constant 3.200000e+01 : f32
    %497 = vector.broadcast %cst_142 : f32 to vector<16x1xf32>
    %498 = arith.divf %496, %497 : vector<16x1xf32>
    %cst_143 = arith.constant 9.99999996E-13 : f32
    %499 = vector.broadcast %cst_143 : f32 to vector<16x1xf32>
    %500 = arith.addf %498, %499 : vector<16x1xf32>
    %501 = math.rsqrt %500 : vector<16x1xf32>
    %502 = vector.broadcast %501 : vector<16x1xf32> to vector<16x32xf32>
    %503 = arith.mulf %493, %502 : vector<16x32xf32>
    %504 = vector.broadcast %289 : vector<1x32xf32> to vector<16x32xf32>
    %505 = arith.mulf %503, %504 : vector<16x32xf32>
    %506 = vector.broadcast %290 : vector<1x32xf32> to vector<16x32xf32>
    %507 = arith.addf %505, %506 : vector<16x32xf32>
    %508 = vector.extract_strided_slice %507 {offsets = [0, 0], sizes = [1, 32], strides = [1, 1]} : vector<16x32xf32> to vector<1x32xf32>
    %509 = vector.extract_strided_slice %507 {offsets = [8, 0], sizes = [1, 32], strides = [1, 1]} : vector<16x32xf32> to vector<1x32xf32>
    %510 = tpu.concatenate %508, %509 in 0 : vector<1x32xf32>, vector<1x32xf32> -> vector<2x32xf32>
    %511 = vector.extract_strided_slice %0 {offsets = [3, 0], sizes = [2, 32], strides = [1, 1]} : vector<5x32xf32> to vector<2x32xf32>
    %512 = vector.extract_strided_slice %0 {offsets = [2, 0], sizes = [1, 2], strides = [1, 1]} : vector<5x32xf32> to vector<1x2xf32>
    %cst_144 = arith.constant dense<0.000000e+00> : vector<2x2xf32>
    %513 = tpu.matmul %510, %511, %cst_144 {dimension_numbers = #tpu.dot_dimension_numbers<[1], [1], [0], [0], [0, 0, 1, 0], [], []>} : vector<2x32xf32>, vector<2x32xf32>, vector<2x2xf32> -> vector<2x2xf32>
    %514 = vector.broadcast %512 : vector<1x2xf32> to vector<2x2xf32>
    %515 = arith.addf %513, %514 : vector<2x2xf32>
    %c0_145 = arith.constant 0 : index
    %c0_146 = arith.constant 0 : index
    %516 = vector.load %arg8[%c0_145, %c0_146] : memref<2x2xf32, #tpu.memory_space<vmem>>, vector<2x2xf32>
    tpu.vector_store %arg8[%c0_145, %c0_146], %515 {strides = array<i32>} : memref<2x2xf32, #tpu.memory_space<vmem>>, vector<2x2xf32>,
    return
  }
}

</mosaic_0001>

<llo_original>
// kernel: bert_fv_forward.1
$region0: #{bert_fv_forward.1}
  #allocation0 [shape = 'u32[]', space=smem, size = 0x4, offset = 0x4, fixed_abs, tag = 'smem constant byte address 0x4 - core index']
  #allocation1 [shape = 'u32[72,128]{1,0:T(1,128)}', space=vmem, size = 0x9000, scoped, tag = 'internal scratch']
  %s0 = inlined_call_operand.vmem [shape: f32[16,32], index: 0, kind: input, shape index: {}]
  %s1 = inlined_call_operand.vmem [shape: f32[2,8], index: 1, kind: input, shape index: {}]
  %s2 = inlined_call_operand.vmem [shape: f32[2,32,96], index: 2, kind: input, shape index: {}]
  %s3 = inlined_call_operand.vmem [shape: f32[2,32,64], index: 3, kind: input, shape index: {}]
  %s4 = inlined_call_operand.vmem [shape: f32[2,96,32], index: 4, kind: input, shape index: {}]
  %s5 = inlined_call_operand.vmem [shape: f32[2,6,32], index: 5, kind: input, shape index: {}]
  %s6 = inlined_call_operand.vmem [shape: f32[2,2,96], index: 6, kind: input, shape index: {}]
  %s7 = inlined_call_operand.vmem [shape: f32[5,32], index: 7, kind: input, shape index: {}]
  %s8 = inlined_call_operand.hbm [shape: f32[2,2], index: 8, kind: output, shape index: {}]
  %s9 = sld [smem:[#allocation0]]
  $region42: #{bert_fv_forward.1} parent=0
    _
  %s11 = ssub.s32 1, %s9
  %s12 = scalar_select 0, %s11, %s9
  $region1: #{bert_fv_forward.1} parent=0
    #allocation2 [shape = 'u8[1024]{0}', space=vmem, size = 0x400, scoped, tag = 'output window, operand 0, single buffered']
    #allocation3 [shape = 's32[1]{0}', space=sflag, size = 0x4, scoped, tag = 'scoped memory for bert_fv_forward.1']
    %13 = vsyncpa [#allocation3], 0
    // Predicated region
    $region2: #{bert_fv_forward.1} parent=1 // pred_check
      _
    $region3: #{bert_fv_forward.1} parent=1 // pred_check_branch
      %15 = sbr.rel (0) target = $region5
    $region4: #{bert_fv_forward.1} parent=1 // pred_region
      _
    $region5: #{bert_fv_forward.1} parent=1 // pred_fallthru
      _
    // Predicated region
    $region6: #{bert_fv_forward.1} parent=1 // pred_check
      _
    $region7: #{bert_fv_forward.1} parent=1 // pred_check_branch
      %17 = sbr.rel (0) target = $region9
    $region8: #{bert_fv_forward.1} parent=1 // pred_region
      _
    $region9: #{bert_fv_forward.1} parent=1 // pred_fallthru
      _
    // Predicated region
    $region10: #{bert_fv_forward.1} parent=1 // pred_check
      _
    $region11: #{bert_fv_forward.1} parent=1 // pred_check_branch
      %19 = sbr.rel (0) target = $region13
    $region12: #{bert_fv_forward.1} parent=1 // pred_region
      _
    $region13: #{bert_fv_forward.1} parent=1 // pred_fallthru
      _
    // Predicated region
    $region14: #{bert_fv_forward.1} parent=1 // pred_check
      _
    $region15: #{bert_fv_forward.1} parent=1 // pred_check_branch
      %21 = sbr.rel (0) target = $region17
    $region16: #{bert_fv_forward.1} parent=1 // pred_region
      _
    $region17: #{bert_fv_forward.1} parent=1 // pred_fallthru
      _
    // Predicated region
    $region18: #{bert_fv_forward.1} parent=1 // pred_check
      _
    $region19: #{bert_fv_forward.1} parent=1 // pred_check_branch
      %23 = sbr.rel (0) target = $region21
    $region20: #{bert_fv_forward.1} parent=1 // pred_region
      _
    $region21: #{bert_fv_forward.1} parent=1 // pred_fallthru
      _
    // Predicated region
    $region22: #{bert_fv_forward.1} parent=1 // pred_check
      _
    $region23: #{bert_fv_forward.1} parent=1 // pred_check_branch
      %25 = sbr.rel (0) target = $region25
    $region24: #{bert_fv_forward.1} parent=1 // pred_region
      _
    $region25: #{bert_fv_forward.1} parent=1 // pred_fallthru
      _
    // Predicated region
    $region26: #{bert_fv_forward.1} parent=1 // pred_check
      _
    $region27: #{bert_fv_forward.1} parent=1 // pred_check_branch
      %27 = sbr.rel (0) target = $region29
    $region28: #{bert_fv_forward.1} parent=1 // pred_region
      _
    $region29: #{bert_fv_forward.1} parent=1 // pred_fallthru
      _
    // Predicated region
    $region30: #{bert_fv_forward.1} parent=1 // pred_check
      _
    $region31: #{bert_fv_forward.1} parent=1 // pred_check_branch
      %29 = sbr.rel (0) target = $region33
    $region32: #{bert_fv_forward.1} parent=1 // pred_region
      _
    $region33: #{bert_fv_forward.1} parent=1 // pred_fallthru
      _
    %v30 = vld [vmem:[%s7] sm:$0x1f]
    %v31 = vld [vmem:[%s0] sm:$0xff]
    %v32 = vld [vmem:[%s0 + $0x8] sm:$0xff]
    %vm33 = vcmask 261120
    %v34 = vsel %vm33, %v31, 0.0
    %35 = vadd.xlane.f32.xlu0 %v34
    %v36 = vpop.xlane.xlu0 %35
    %v37 = vsel %vm33, %v32, 0.0
    %38 = vadd.xlane.f32.xlu0 %v37
    %v39 = vpop.xlane.xlu0 %38
    %v40 = vrcp.pop 32.0
    %v41 = vmul.f32 32.0, %v40
    %v42 = vsub.f32 1.0, %v41
    %v43 = vmul.f32 %v40, %v42
    %v44 = vadd.f32 %v40, %v43
    %vm45 = vweird.f32 %v40
    %v46 = vsel %vm45, %v40, %v44
    %v47 = vmul.f32 %v36, %v46
    %v48 = vmul.f32 %v39, %v46
    %v49 = vsub.f32 %v31, %v47
    %v50 = vsub.f32 %v32, %v48
    %v51 = vmul.f32 %v49, %v49
    %v52 = vmul.f32 %v50, %v50
    %v53 = vsel %vm33, %v51, 0.0
    %54 = vadd.xlane.f32.xlu0 %v53
    %v55 = vpop.xlane.xlu0 %54
    %v56 = vsel %vm33, %v52, 0.0
    %57 = vadd.xlane.f32.xlu0 %v56
    %v58 = vpop.xlane.xlu0 %57
    %v59 = vmul.f32 %v55, %v46
    %v60 = vmul.f32 %v58, %v46
    %v61 = vadd.f32 %v59, 1e-12
    %v62 = vadd.f32 %v60, 1e-12
    %v63 = vrsqrt.pop %v61
    %v64 = vmul.f32 %v63, %v61
    %v65 = vmul.f32 %v64, %v63
    %v66 = vmul.f32 0.5, %v65
    %v67 = vsub.f32 1.5, %v66
    %v68 = vmul.f32 %v63, %v67
    %vm69 = vweird.f32 %v61
    %vm70 = vweird.f32 %v63
    %vm71 = vmor %vm69, %vm70
    %v72 = vsel %vm71, %v63, %v68
    %v73 = vrsqrt.pop %v62
    %v74 = vmul.f32 %v73, %v62
    %v75 = vmul.f32 %v74, %v73
    %v76 = vmul.f32 0.5, %v75
    %v77 = vsub.f32 1.5, %v76
    %v78 = vmul.f32 %v73, %v77
    %vm79 = vweird.f32 %v62
    %vm80 = vweird.f32 %v73
    %vm81 = vmor %vm79, %vm80
    %v82 = vsel %vm81, %v73, %v78
    %v83 = vmul.f32 %v49, %v72
    %v84 = vmul.f32 %v50, %v82
    %v85 = vperm.slane %v30, 0
    %v86 = vmul.f32 %v83, %v85
    %v87 = vmul.f32 %v84, %v85
    %v88 = vperm.slane %v30, 1
    %v89 = vadd.f32 %v86, %v88
    %v90 = vadd.f32 %v87, %v88
    %v91 = vld [vmem:[%s1] sm:$0x1]
    %v92 = vsub.f32 1.0, %v91
    %v93 = vmul.f32 %v92, -1e+09
    %v94 = vperm.slane %v93, 0
    %v95 = vld [vmem:[%s1 + $0x1] sm:$0x1]
    %v96 = vsub.f32 1.0, %v95
    %v97 = vmul.f32 %v96, -1e+09
    %v98 = vperm.slane %v97, 0
    %v99 = vld [vmem:[%s2] sm:$0xff]
    %v100 = vld [vmem:[%s2 + $0x8] sm:$0xff]
    %v101 = vld [vmem:[%s2 + $0x10] sm:$0xff]
    %v102 = vld [vmem:[%s2 + $0x18] sm:$0xff]
    %v103 = vld [vmem:[%s6] sm:$0x3]
    %v104 = vld [vmem:[%s4] sm:$0xff]
    %v105 = vld [vmem:[%s4 + $0x8] sm:$0xff]
    %v106 = vld [vmem:[%s4 + $0x10] sm:$0xff]
    %v107 = vld [vmem:[%s4 + $0x18] sm:$0xff]
    %v108 = vld [vmem:[%s4 + $0x20] sm:$0xff]
    %v109 = vld [vmem:[%s4 + $0x28] sm:$0xff]
    %v110 = vld [vmem:[%s4 + $0x30] sm:$0xff]
    %v111 = vld [vmem:[%s4 + $0x38] sm:$0xff]
    %v112 = vld [vmem:[%s4 + $0x40] sm:$0xff]
    %v113 = vld [vmem:[%s4 + $0x48] sm:$0xff]
    %v114 = vld [vmem:[%s4 + $0x50] sm:$0xff]
    %v115 = vld [vmem:[%s4 + $0x58] sm:$0xff]
    %v116 = vld [vmem:[%s5] sm:$0x3f]
    %v117 = vperm.slane %v103, 0
    %v119 = vsel %vm33, %v89, 0
    %v122 = vsel %vm33, %v90, 0
    %124 = vmatpush.msra.mxu0 0.0
    %125 = vmatpush.msra.mxu0 0.0
    %126 = vmatpush.msra.mxu0 0.0
    %127 = vmatpush.msra.mxu0 0.0
    %128 = vmatpush.msra.mxu0 0.0
    %129 = vmatpush.msra.mxu0 0.0
    %130 = vmatpush.msra.mxu0 0.0
    %131 = vmatpush.msra.mxu0 0.0
    %132 = vmatpush.msra.mxu0 0.0
    %133 = vmatpush.msra.mxu0 0.0
    %134 = vmatpush.msra.mxu0 0.0
    %135 = vmatpush.msra.mxu0 0.0
    %136 = vmatpush.msra.mxu0 %v102
    %137 = vmatpush.msra.mxu0 %v101
    %138 = vmatpush.msra.mxu0 %v100
    %139 = vmatpush.msra.mxu0 %v99
    %140 = vmatmul.f32.gmra.mxu0 %v119
    %v141 = vpop.f32.mrf.mxu0
    %v142 = vadd.f32 %v117, %v141
    %143 = vmatmul.f32.gmra.mxu0 %v122
    %v144 = vpop.f32.mrf.mxu0
    %v145 = vadd.f32 %v117, %v144
    %146 = vdwg.mxu0
    %148 = vrot.lane.b32.xlu0 %v142, 96
    %v149 = vpop.permute.xlu0 %148
    %vm150 = vcmask 64512
    %v151 = vsel %vm150, %v142, 0
    %v153 = vsel %vm150, %v149, 0
    %155 = vmatpush.xpose.msra.mxu0 0.0
    %156 = vmatpush.xpose.msra.mxu0 0.0
    %157 = vmatpush.xpose.msra.mxu0 0.0
    %158 = vmatpush.xpose.msra.mxu0 0.0
    %159 = vmatpush.xpose.msra.mxu0 0.0
    %160 = vmatpush.xpose.msra.mxu0 0.0
    %161 = vmatpush.xpose.msra.mxu0 0.0
    %162 = vmatpush.xpose.msra.mxu0 0.0
    %163 = vmatpush.xpose.msra.mxu0 0.0
    %164 = vmatpush.xpose.msra.mxu0 0.0
    %165 = vmatpush.xpose.msra.mxu0 0.0
    %166 = vmatpush.xpose.msra.mxu0 0.0
    %167 = vmatpush.xpose.msra.mxu0 0.0
    %168 = vmatpush.xpose.msra.mxu0 0.0
    %169 = vmatpush.xpose.msra.mxu0 0.0
    %170 = vmatpush.xpose.msra.mxu0 %v153
    %171 = vmatmul.f32.gmra.mxu0 %v151
    %v172 = vpop.f32.mrf.mxu0
    %v173 = vadd.f32 %v94, %v172
    %174 = vdwg.mxu0
    %v175 = vsel %vm150, %v173, -inf
    %176 = vmax.xlane.f32.xlu0 %v175
    %v177 = vpop.xlane.xlu0 %176
    %v178 = vsub.f32 %v173, %v177
    %v179 = vmul.f32 %v178, 1.442695
    %v180 = vpow.pop %v179
    %v181 = vsel %vm150, %v180, 0.0
    %182 = vadd.xlane.f32.xlu0 %v181
    %v183 = vpop.xlane.xlu0 %182
    %v184 = vrcp.pop %v183
    %v185 = vmul.f32 %v180, %v184
    %186 = vrot.lane.b32.xlu0 %v142, 64
    %v187 = vpop.permute.xlu0 %186
    %v190 = vsel %vm150, %v185, 0
    %192 = vmatpush.msra.mxu0 0.0
    %193 = vmatpush.msra.mxu0 0.0
    %194 = vmatpush.msra.mxu0 0.0
    %195 = vmatpush.msra.mxu0 0.0
    %196 = vmatpush.msra.mxu0 0.0
    %197 = vmatpush.msra.mxu0 0.0
    %198 = vmatpush.msra.mxu0 0.0
    %199 = vmatpush.msra.mxu0 0.0
    %200 = vmatpush.msra.mxu0 0.0
    %201 = vmatpush.msra.mxu0 0.0
    %202 = vmatpush.msra.mxu0 0.0
    %203 = vmatpush.msra.mxu0 0.0
    %204 = vmatpush.msra.mxu0 0.0
    %205 = vmatpush.msra.mxu0 0.0
    %206 = vmatpush.msra.mxu0 0.0
    %207 = vmatpush.msra.mxu0 %v187
    %208 = vmatmul.f32.gmra.mxu0 %v190
    %v209 = vpop.f32.mrf.mxu0
    %v210 = vadd.f32 0.0, %v209
    %211 = vdwg.mxu0
    %213 = vrot.lane.b32.xlu0 %v145, 96
    %v214 = vpop.permute.xlu0 %213
    %v215 = vsel %vm150, %v145, 0
    %v217 = vsel %vm150, %v214, 0
    %219 = vmatpush.xpose.msra.mxu0 0.0
    %220 = vmatpush.xpose.msra.mxu0 0.0
    %221 = vmatpush.xpose.msra.mxu0 0.0
    %222 = vmatpush.xpose.msra.mxu0 0.0
    %223 = vmatpush.xpose.msra.mxu0 0.0
    %224 = vmatpush.xpose.msra.mxu0 0.0
    %225 = vmatpush.xpose.msra.mxu0 0.0
    %226 = vmatpush.xpose.msra.mxu0 0.0
    %227 = vmatpush.xpose.msra.mxu0 0.0
    %228 = vmatpush.xpose.msra.mxu0 0.0
    %229 = vmatpush.xpose.msra.mxu0 0.0
    %230 = vmatpush.xpose.msra.mxu0 0.0
    %231 = vmatpush.xpose.msra.mxu0 0.0
    %232 = vmatpush.xpose.msra.mxu0 0.0
    %233 = vmatpush.xpose.msra.mxu0 0.0
    %234 = vmatpush.xpose.msra.mxu0 %v217
    %235 = vmatmul.f32.gmra.mxu0 %v215
    %v236 = vpop.f32.mrf.mxu0
    %v237 = vadd.f32 %v98, %v236
    %238 = vdwg.mxu0
    %v239 = vsel %vm150, %v237, -inf
    %240 = vmax.xlane.f32.xlu0 %v239
    %v241 = vpop.xlane.xlu0 %240
    %v242 = vsub.f32 %v237, %v241
    %v243 = vmul.f32 %v242, 1.442695
    %v244 = vpow.pop %v243
    %v245 = vsel %vm150, %v244, 0.0
    %246 = vadd.xlane.f32.xlu0 %v245
    %v247 = vpop.xlane.xlu0 %246
    %v248 = vrcp.pop %v247
    %v249 = vmul.f32 %v244, %v248
    %250 = vrot.lane.b32.xlu0 %v145, 64
    %v251 = vpop.permute.xlu0 %250
    %v254 = vsel %vm150, %v249, 0
    %256 = vmatpush.msra.mxu0 0.0
    %257 = vmatpush.msra.mxu0 0.0
    %258 = vmatpush.msra.mxu0 0.0
    %259 = vmatpush.msra.mxu0 0.0
    %260 = vmatpush.msra.mxu0 0.0
    %261 = vmatpush.msra.mxu0 0.0
    %262 = vmatpush.msra.mxu0 0.0
    %263 = vmatpush.msra.mxu0 0.0
    %264 = vmatpush.msra.mxu0 0.0
    %265 = vmatpush.msra.mxu0 0.0
    %266 = vmatpush.msra.mxu0 0.0
    %267 = vmatpush.msra.mxu0 0.0
    %268 = vmatpush.msra.mxu0 0.0
    %269 = vmatpush.msra.mxu0 0.0
    %270 = vmatpush.msra.mxu0 0.0
    %271 = vmatpush.msra.mxu0 %v251
    %272 = vmatmul.f32.gmra.mxu0 %v254
    %v273 = vpop.f32.mrf.mxu0
    %v274 = vadd.f32 0.0, %v273
    %275 = vdwg.mxu0
    %276 = vrot.lane.b32.xlu0 %v142, 120
    %v277 = vpop.permute.xlu0 %276
    %278 = vrot.lane.b32.xlu0 %v142, 88
    %v279 = vpop.permute.xlu0 %278
    %v280 = vsel %vm150, %v277, 0
    %v282 = vsel %vm150, %v279, 0
    %284 = vmatpush.xpose.msra.mxu0 0.0
    %285 = vmatpush.xpose.msra.mxu0 0.0
    %286 = vmatpush.xpose.msra.mxu0 0.0
    %287 = vmatpush.xpose.msra.mxu0 0.0
    %288 = vmatpush.xpose.msra.mxu0 0.0
    %289 = vmatpush.xpose.msra.mxu0 0.0
    %290 = vmatpush.xpose.msra.mxu0 0.0
    %291 = vmatpush.xpose.msra.mxu0 0.0
    %292 = vmatpush.xpose.msra.mxu0 0.0
    %293 = vmatpush.xpose.msra.mxu0 0.0
    %294 = vmatpush.xpose.msra.mxu0 0.0
    %295 = vmatpush.xpose.msra.mxu0 0.0
    %296 = vmatpush.xpose.msra.mxu0 0.0
    %297 = vmatpush.xpose.msra.mxu0 0.0
    %298 = vmatpush.xpose.msra.mxu0 0.0
    %299 = vmatpush.xpose.msra.mxu0 %v282
    %300 = vmatmul.f32.gmra.mxu0 %v280
    %v301 = vpop.f32.mrf.mxu0
    %v302 = vadd.f32 %v94, %v301
    %303 = vdwg.mxu0
    %v304 = vsel %vm150, %v302, -inf
    %305 = vmax.xlane.f32.xlu0 %v304
    %v306 = vpop.xlane.xlu0 %305
    %v307 = vsub.f32 %v302, %v306
    %v308 = vmul.f32 %v307, 1.442695
    %v309 = vpow.pop %v308
    %v310 = vsel %vm150, %v309, 0.0
    %311 = vadd.xlane.f32.xlu0 %v310
    %v312 = vpop.xlane.xlu0 %311
    %v313 = vrcp.pop %v312
    %v314 = vmul.f32 %v309, %v313
    %315 = vrot.lane.b32.xlu0 %v142, 56
    %v316 = vpop.permute.xlu0 %315
    %v319 = vsel %vm150, %v314, 0
    %321 = vmatpush.msra.mxu0 0.0
    %322 = vmatpush.msra.mxu0 0.0
    %323 = vmatpush.msra.mxu0 0.0
    %324 = vmatpush.msra.mxu0 0.0
    %325 = vmatpush.msra.mxu0 0.0
    %326 = vmatpush.msra.mxu0 0.0
    %327 = vmatpush.msra.mxu0 0.0
    %328 = vmatpush.msra.mxu0 0.0
    %329 = vmatpush.msra.mxu0 0.0
    %330 = vmatpush.msra.mxu0 0.0
    %331 = vmatpush.msra.mxu0 0.0
    %332 = vmatpush.msra.mxu0 0.0
    %333 = vmatpush.msra.mxu0 0.0
    %334 = vmatpush.msra.mxu0 0.0
    %335 = vmatpush.msra.mxu0 0.0
    %336 = vmatpush.msra.mxu0 %v316
    %337 = vmatmul.f32.gmra.mxu0 %v319
    %v338 = vpop.f32.mrf.mxu0
    %v339 = vadd.f32 0.0, %v338
    %340 = vdwg.mxu0
    %341 = vrot.lane.b32.xlu0 %v145, 120
    %v342 = vpop.permute.xlu0 %341
    %343 = vrot.lane.b32.xlu0 %v145, 88
    %v344 = vpop.permute.xlu0 %343
    %v345 = vsel %vm150, %v342, 0
    %v347 = vsel %vm150, %v344, 0
    %349 = vmatpush.xpose.msra.mxu0 0.0
    %350 = vmatpush.xpose.msra.mxu0 0.0
    %351 = vmatpush.xpose.msra.mxu0 0.0
    %352 = vmatpush.xpose.msra.mxu0 0.0
    %353 = vmatpush.xpose.msra.mxu0 0.0
    %354 = vmatpush.xpose.msra.mxu0 0.0
    %355 = vmatpush.xpose.msra.mxu0 0.0
    %356 = vmatpush.xpose.msra.mxu0 0.0
    %357 = vmatpush.xpose.msra.mxu0 0.0
    %358 = vmatpush.xpose.msra.mxu0 0.0
    %359 = vmatpush.xpose.msra.mxu0 0.0
    %360 = vmatpush.xpose.msra.mxu0 0.0
    %361 = vmatpush.xpose.msra.mxu0 0.0
    %362 = vmatpush.xpose.msra.mxu0 0.0
    %363 = vmatpush.xpose.msra.mxu0 0.0
    %364 = vmatpush.xpose.msra.mxu0 %v347
    %365 = vmatmul.f32.gmra.mxu0 %v345
    %v366 = vpop.f32.mrf.mxu0
    %v367 = vadd.f32 %v98, %v366
    %368 = vdwg.mxu0
    %v369 = vsel %vm150, %v367, -inf
    %370 = vmax.xlane.f32.xlu0 %v369
    %v371 = vpop.xlane.xlu0 %370
    %v372 = vsub.f32 %v367, %v371
    %v373 = vmul.f32 %v372, 1.442695
    %v374 = vpow.pop %v373
    %v375 = vsel %vm150, %v374, 0.0
    %376 = vadd.xlane.f32.xlu0 %v375
    %v377 = vpop.xlane.xlu0 %376
    %v378 = vrcp.pop %v377
    %v379 = vmul.f32 %v374, %v378
    %380 = vrot.lane.b32.xlu0 %v145, 56
    %v381 = vpop.permute.xlu0 %380
    %v384 = vsel %vm150, %v379, 0
    %386 = vmatpush.msra.mxu0 0.0
    %387 = vmatpush.msra.mxu0 0.0
    %388 = vmatpush.msra.mxu0 0.0
    %389 = vmatpush.msra.mxu0 0.0
    %390 = vmatpush.msra.mxu0 0.0
    %391 = vmatpush.msra.mxu0 0.0
    %392 = vmatpush.msra.mxu0 0.0
    %393 = vmatpush.msra.mxu0 0.0
    %394 = vmatpush.msra.mxu0 0.0
    %395 = vmatpush.msra.mxu0 0.0
    %396 = vmatpush.msra.mxu0 0.0
    %397 = vmatpush.msra.mxu0 0.0
    %398 = vmatpush.msra.mxu0 0.0
    %399 = vmatpush.msra.mxu0 0.0
    %400 = vmatpush.msra.mxu0 0.0
    %401 = vmatpush.msra.mxu0 %v381
    %402 = vmatmul.f32.gmra.mxu0 %v384
    %v403 = vpop.f32.mrf.mxu0
    %v404 = vadd.f32 0.0, %v403
    %405 = vdwg.mxu0
    %406 = vrot.lane.b32.xlu0 %v142, 112
    %v407 = vpop.permute.xlu0 %406
    %408 = vrot.lane.b32.xlu0 %v142, 80
    %v409 = vpop.permute.xlu0 %408
    %v410 = vsel %vm150, %v407, 0
    %v412 = vsel %vm150, %v409, 0
    %414 = vmatpush.xpose.msra.mxu0 0.0
    %415 = vmatpush.xpose.msra.mxu0 0.0
    %416 = vmatpush.xpose.msra.mxu0 0.0
    %417 = vmatpush.xpose.msra.mxu0 0.0
    %418 = vmatpush.xpose.msra.mxu0 0.0
    %419 = vmatpush.xpose.msra.mxu0 0.0
    %420 = vmatpush.xpose.msra.mxu0 0.0
    %421 = vmatpush.xpose.msra.mxu0 0.0
    %422 = vmatpush.xpose.msra.mxu0 0.0
    %423 = vmatpush.xpose.msra.mxu0 0.0
    %424 = vmatpush.xpose.msra.mxu0 0.0
    %425 = vmatpush.xpose.msra.mxu0 0.0
    %426 = vmatpush.xpose.msra.mxu0 0.0
    %427 = vmatpush.xpose.msra.mxu0 0.0
    %428 = vmatpush.xpose.msra.mxu0 0.0
    %429 = vmatpush.xpose.msra.mxu0 %v412
    %430 = vmatmul.f32.gmra.mxu0 %v410
    %v431 = vpop.f32.mrf.mxu0
    %v432 = vadd.f32 %v94, %v431
    %433 = vdwg.mxu0
    %v434 = vsel %vm150, %v432, -inf
    %435 = vmax.xlane.f32.xlu0 %v434
    %v436 = vpop.xlane.xlu0 %435
    %v437 = vsub.f32 %v432, %v436
    %v438 = vmul.f32 %v437, 1.442695
    %v439 = vpow.pop %v438
    %v440 = vsel %vm150, %v439, 0.0
    %441 = vadd.xlane.f32.xlu0 %v440
    %v442 = vpop.xlane.xlu0 %441
    %v443 = vrcp.pop %v442
    %v444 = vmul.f32 %v439, %v443
    %445 = vrot.lane.b32.xlu0 %v142, 48
    %v446 = vpop.permute.xlu0 %445
    %v449 = vsel %vm150, %v444, 0
    %451 = vmatpush.msra.mxu0 0.0
    %452 = vmatpush.msra.mxu0 0.0
    %453 = vmatpush.msra.mxu0 0.0
    %454 = vmatpush.msra.mxu0 0.0
    %455 = vmatpush.msra.mxu0 0.0
    %456 = vmatpush.msra.mxu0 0.0
    %457 = vmatpush.msra.mxu0 0.0
    %458 = vmatpush.msra.mxu0 0.0
    %459 = vmatpush.msra.mxu0 0.0
    %460 = vmatpush.msra.mxu0 0.0
    %461 = vmatpush.msra.mxu0 0.0
    %462 = vmatpush.msra.mxu0 0.0
    %463 = vmatpush.msra.mxu0 0.0
    %464 = vmatpush.msra.mxu0 0.0
    %465 = vmatpush.msra.mxu0 0.0
    %466 = vmatpush.msra.mxu0 %v446
    %467 = vmatmul.f32.gmra.mxu0 %v449
    %v468 = vpop.f32.mrf.mxu0
    %v469 = vadd.f32 0.0, %v468
    %470 = vdwg.mxu0
    %471 = vrot.lane.b32.xlu0 %v145, 112
    %v472 = vpop.permute.xlu0 %471
    %473 = vrot.lane.b32.xlu0 %v145, 80
    %v474 = vpop.permute.xlu0 %473
    %v475 = vsel %vm150, %v472, 0
    %v477 = vsel %vm150, %v474, 0
    %479 = vmatpush.xpose.msra.mxu0 0.0
    %480 = vmatpush.xpose.msra.mxu0 0.0
    %481 = vmatpush.xpose.msra.mxu0 0.0
    %482 = vmatpush.xpose.msra.mxu0 0.0
    %483 = vmatpush.xpose.msra.mxu0 0.0
    %484 = vmatpush.xpose.msra.mxu0 0.0
    %485 = vmatpush.xpose.msra.mxu0 0.0
    %486 = vmatpush.xpose.msra.mxu0 0.0
    %487 = vmatpush.xpose.msra.mxu0 0.0
    %488 = vmatpush.xpose.msra.mxu0 0.0
    %489 = vmatpush.xpose.msra.mxu0 0.0
    %490 = vmatpush.xpose.msra.mxu0 0.0
    %491 = vmatpush.xpose.msra.mxu0 0.0
    %492 = vmatpush.xpose.msra.mxu0 0.0
    %493 = vmatpush.xpose.msra.mxu0 0.0
    %494 = vmatpush.xpose.msra.mxu0 %v477
    %495 = vmatmul.f32.gmra.mxu0 %v475
    %v496 = vpop.f32.mrf.mxu0
    %v497 = vadd.f32 %v98, %v496
    %498 = vdwg.mxu0
    %v499 = vsel %vm150, %v497, -inf
    %500 = vmax.xlane.f32.xlu0 %v499
    %v501 = vpop.xlane.xlu0 %500
    %v502 = vsub.f32 %v497, %v501
    %v503 = vmul.f32 %v502, 1.442695
    %v504 = vpow.pop %v503
    %v505 = vsel %vm150, %v504, 0.0
    %506 = vadd.xlane.f32.xlu0 %v505
    %v507 = vpop.xlane.xlu0 %506
    %v508 = vrcp.pop %v507
    %v509 = vmul.f32 %v504, %v508
    %510 = vrot.lane.b32.xlu0 %v145, 48
    %v511 = vpop.permute.xlu0 %510
    %v514 = vsel %vm150, %v509, 0
    %516 = vmatpush.msra.mxu0 0.0
    %517 = vmatpush.msra.mxu0 0.0
    %518 = vmatpush.msra.mxu0 0.0
    %519 = vmatpush.msra.mxu0 0.0
    %520 = vmatpush.msra.mxu0 0.0
    %521 = vmatpush.msra.mxu0 0.0
    %522 = vmatpush.msra.mxu0 0.0
    %523 = vmatpush.msra.mxu0 0.0
    %524 = vmatpush.msra.mxu0 0.0
    %525 = vmatpush.msra.mxu0 0.0
    %526 = vmatpush.msra.mxu0 0.0
    %527 = vmatpush.msra.mxu0 0.0
    %528 = vmatpush.msra.mxu0 0.0
    %529 = vmatpush.msra.mxu0 0.0
    %530 = vmatpush.msra.mxu0 0.0
    %531 = vmatpush.msra.mxu0 %v511
    %532 = vmatmul.f32.gmra.mxu0 %v514
    %v533 = vpop.f32.mrf.mxu0
    %v534 = vadd.f32 0.0, %v533
    %535 = vdwg.mxu0
    %536 = vrot.lane.b32.xlu0 %v142, 104
    %v537 = vpop.permute.xlu0 %536
    %538 = vrot.lane.b32.xlu0 %v142, 72
    %v539 = vpop.permute.xlu0 %538
    %v540 = vsel %vm150, %v537, 0
    %v542 = vsel %vm150, %v539, 0
    %544 = vmatpush.xpose.msra.mxu0 0.0
    %545 = vmatpush.xpose.msra.mxu0 0.0
    %546 = vmatpush.xpose.msra.mxu0 0.0
    %547 = vmatpush.xpose.msra.mxu0 0.0
    %548 = vmatpush.xpose.msra.mxu0 0.0
    %549 = vmatpush.xpose.msra.mxu0 0.0
    %550 = vmatpush.xpose.msra.mxu0 0.0
    %551 = vmatpush.xpose.msra.mxu0 0.0
    %552 = vmatpush.xpose.msra.mxu0 0.0
    %553 = vmatpush.xpose.msra.mxu0 0.0
    %554 = vmatpush.xpose.msra.mxu0 0.0
    %555 = vmatpush.xpose.msra.mxu0 0.0
    %556 = vmatpush.xpose.msra.mxu0 0.0
    %557 = vmatpush.xpose.msra.mxu0 0.0
    %558 = vmatpush.xpose.msra.mxu0 0.0
    %559 = vmatpush.xpose.msra.mxu0 %v542
    %560 = vmatmul.f32.gmra.mxu0 %v540
    %v561 = vpop.f32.mrf.mxu0
    %v562 = vadd.f32 %v94, %v561
    %563 = vdwg.mxu0
    %v564 = vsel %vm150, %v562, -inf
    %565 = vmax.xlane.f32.xlu0 %v564
    %v566 = vpop.xlane.xlu0 %565
    %v567 = vsub.f32 %v562, %v566
    %v568 = vmul.f32 %v567, 1.442695
    %v569 = vpow.pop %v568
    %v570 = vsel %vm150, %v569, 0.0
    %571 = vadd.xlane.f32.xlu0 %v570
    %v572 = vpop.xlane.xlu0 %571
    %v573 = vrcp.pop %v572
    %v574 = vmul.f32 %v569, %v573
    %575 = vrot.lane.b32.xlu0 %v142, 40
    %v576 = vpop.permute.xlu0 %575
    %v579 = vsel %vm150, %v574, 0
    %581 = vmatpush.msra.mxu0 0.0
    %582 = vmatpush.msra.mxu0 0.0
    %583 = vmatpush.msra.mxu0 0.0
    %584 = vmatpush.msra.mxu0 0.0
    %585 = vmatpush.msra.mxu0 0.0
    %586 = vmatpush.msra.mxu0 0.0
    %587 = vmatpush.msra.mxu0 0.0
    %588 = vmatpush.msra.mxu0 0.0
    %589 = vmatpush.msra.mxu0 0.0
    %590 = vmatpush.msra.mxu0 0.0
    %591 = vmatpush.msra.mxu0 0.0
    %592 = vmatpush.msra.mxu0 0.0
    %593 = vmatpush.msra.mxu0 0.0
    %594 = vmatpush.msra.mxu0 0.0
    %595 = vmatpush.msra.mxu0 0.0
    %596 = vmatpush.msra.mxu0 %v576
    %597 = vmatmul.f32.gmra.mxu0 %v579
    %v598 = vpop.f32.mrf.mxu0
    %v599 = vadd.f32 0.0, %v598
    %600 = vdwg.mxu0
    %601 = vrot.lane.b32.xlu0 %v145, 104
    %v602 = vpop.permute.xlu0 %601
    %603 = vrot.lane.b32.xlu0 %v145, 72
    %v604 = vpop.permute.xlu0 %603
    %v605 = vsel %vm150, %v602, 0
    %v607 = vsel %vm150, %v604, 0
    %609 = vmatpush.xpose.msra.mxu0 0.0
    %610 = vmatpush.xpose.msra.mxu0 0.0
    %611 = vmatpush.xpose.msra.mxu0 0.0
    %612 = vmatpush.xpose.msra.mxu0 0.0
    %613 = vmatpush.xpose.msra.mxu0 0.0
    %614 = vmatpush.xpose.msra.mxu0 0.0
    %615 = vmatpush.xpose.msra.mxu0 0.0
    %616 = vmatpush.xpose.msra.mxu0 0.0
    %617 = vmatpush.xpose.msra.mxu0 0.0
    %618 = vmatpush.xpose.msra.mxu0 0.0
    %619 = vmatpush.xpose.msra.mxu0 0.0
    %620 = vmatpush.xpose.msra.mxu0 0.0
    %621 = vmatpush.xpose.msra.mxu0 0.0
    %622 = vmatpush.xpose.msra.mxu0 0.0
    %623 = vmatpush.xpose.msra.mxu0 0.0
    %624 = vmatpush.xpose.msra.mxu0 %v607
    %625 = vmatmul.f32.gmra.mxu0 %v605
    %v626 = vpop.f32.mrf.mxu0
    %v627 = vadd.f32 %v98, %v626
    %628 = vdwg.mxu0
    %v629 = vsel %vm150, %v627, -inf
    %630 = vmax.xlane.f32.xlu0 %v629
    %v631 = vpop.xlane.xlu0 %630
    %v632 = vsub.f32 %v627, %v631
    %v633 = vmul.f32 %v632, 1.442695
    %v634 = vpow.pop %v633
    %v635 = vsel %vm150, %v634, 0.0
    %636 = vadd.xlane.f32.xlu0 %v635
    %v637 = vpop.xlane.xlu0 %636
    %v638 = vrcp.pop %v637
    %v639 = vmul.f32 %v634, %v638
    %640 = vrot.lane.b32.xlu0 %v145, 40
    %v641 = vpop.permute.xlu0 %640
    %v644 = vsel %vm150, %v639, 0
    %646 = vmatpush.msra.mxu0 0.0
    %647 = vmatpush.msra.mxu0 0.0
    %648 = vmatpush.msra.mxu0 0.0
    %649 = vmatpush.msra.mxu0 0.0
    %650 = vmatpush.msra.mxu0 0.0
    %651 = vmatpush.msra.mxu0 0.0
    %652 = vmatpush.msra.mxu0 0.0
    %653 = vmatpush.msra.mxu0 0.0
    %654 = vmatpush.msra.mxu0 0.0
    %655 = vmatpush.msra.mxu0 0.0
    %656 = vmatpush.msra.mxu0 0.0
    %657 = vmatpush.msra.mxu0 0.0
    %658 = vmatpush.msra.mxu0 0.0
    %659 = vmatpush.msra.mxu0 0.0
    %660 = vmatpush.msra.mxu0 0.0
    %661 = vmatpush.msra.mxu0 %v641
    %662 = vmatmul.f32.gmra.mxu0 %v644
    %v663 = vpop.f32.mrf.mxu0
    %v664 = vadd.f32 0.0, %v663
    %665 = vdwg.mxu0
    %668 = vrot.lane.b32.xlu0 %v339, 8
    %v669 = vpop.permute.xlu0 %668
    %670 = vrot.lane.b32.xlu0 %v404, 8
    %v671 = vpop.permute.xlu0 %670
    %676 = vrot.lane.b32.xlu0 %v469, 16
    %v677 = vpop.permute.xlu0 %676
    %678 = vrot.lane.b32.xlu0 %v534, 16
    %v679 = vpop.permute.xlu0 %678
    %684 = vrot.lane.b32.xlu0 %v599, 24
    %v685 = vpop.permute.xlu0 %684
    %686 = vrot.lane.b32.xlu0 %v664, 24
    %v687 = vpop.permute.xlu0 %686
    %v690 = vsel %vm150, %v210, %v669
    %v691 = vsel %vm150, %v274, %v671
    %vm692 = vcmask 130048
    %v693 = vsel %vm692, %v690, %v677
    %v694 = vsel %vm692, %v691, %v679
    %vm695 = vcmask 195584
    %v696 = vsel %vm695, %v693, %v685
    %v697 = vsel %vm695, %v694, %v687
    %v698 = vperm.slane %v116, 0
    %v700 = vsel %vm33, %v696, 0
    %v703 = vsel %vm33, %v697, 0
    %705 = vmatpush.msra.mxu0 0.0
    %706 = vmatpush.msra.mxu0 0.0
    %707 = vmatpush.msra.mxu0 0.0
    %708 = vmatpush.msra.mxu0 0.0
    %709 = vmatpush.msra.mxu0 0.0
    %710 = vmatpush.msra.mxu0 0.0
    %711 = vmatpush.msra.mxu0 0.0
    %712 = vmatpush.msra.mxu0 0.0
    %713 = vmatpush.msra.mxu0 0.0
    %714 = vmatpush.msra.mxu0 0.0
    %715 = vmatpush.msra.mxu0 0.0
    %716 = vmatpush.msra.mxu0 0.0
    %717 = vmatpush.msra.mxu0 %v107
    %718 = vmatpush.msra.mxu0 %v106
    %719 = vmatpush.msra.mxu0 %v105
    %720 = vmatpush.msra.mxu0 %v104
    %721 = vmatmul.f32.gmra.mxu0 %v700
    %v722 = vpop.f32.mrf.mxu0
    %v723 = vadd.f32 %v698, %v722
    %724 = vmatmul.f32.gmra.mxu0 %v703
    %v725 = vpop.f32.mrf.mxu0
    %v726 = vadd.f32 %v698, %v725
    %727 = vdwg.mxu0
    %v728 = vadd.f32 %v723, %v89
    %v729 = vadd.f32 %v726, %v90
    %v730 = vsel %vm33, %v728, 0.0
    %731 = vadd.xlane.f32.xlu0 %v730
    %v732 = vpop.xlane.xlu0 %731
    %v733 = vsel %vm33, %v729, 0.0
    %734 = vadd.xlane.f32.xlu0 %v733
    %v735 = vpop.xlane.xlu0 %734
    %v736 = vmul.f32 %v732, %v46
    %v737 = vmul.f32 %v735, %v46
    %v738 = vsub.f32 %v728, %v736
    %v739 = vsub.f32 %v729, %v737
    %v740 = vmul.f32 %v738, %v738
    %v741 = vmul.f32 %v739, %v739
    %v742 = vsel %vm33, %v740, 0.0
    %743 = vadd.xlane.f32.xlu0 %v742
    %v744 = vpop.xlane.xlu0 %743
    %v745 = vsel %vm33, %v741, 0.0
    %746 = vadd.xlane.f32.xlu0 %v745
    %v747 = vpop.xlane.xlu0 %746
    %v748 = vmul.f32 %v744, %v46
    %v749 = vmul.f32 %v747, %v46
    %v750 = vadd.f32 %v748, 1e-12
    %v751 = vadd.f32 %v749, 1e-12
    %v752 = vrsqrt.pop %v750
    %v753 = vmul.f32 %v752, %v750
    %v754 = vmul.f32 %v753, %v752
    %v755 = vmul.f32 0.5, %v754
    %v756 = vsub.f32 1.5, %v755
    %v757 = vmul.f32 %v752, %v756
    %vm758 = vweird.f32 %v750
    %vm759 = vweird.f32 %v752
    %vm760 = vmor %vm758, %vm759
    %v761 = vsel %vm760, %v752, %v757
    %v762 = vrsqrt.pop %v751
    %v763 = vmul.f32 %v762, %v751
    %v764 = vmul.f32 %v763, %v762
    %v765 = vmul.f32 0.5, %v764
    %v766 = vsub.f32 1.5, %v765
    %v767 = vmul.f32 %v762, %v766
    %vm768 = vweird.f32 %v751
    %vm769 = vweird.f32 %v762
    %vm770 = vmor %vm768, %vm769
    %v771 = vsel %vm770, %v762, %v767
    %v772 = vmul.f32 %v738, %v761
    %v773 = vmul.f32 %v739, %v771
    %v774 = vperm.slane %v116, 1
    %v775 = vmul.f32 %v772, %v774
    %v776 = vmul.f32 %v773, %v774
    %v777 = vperm.slane %v116, 2
    %v778 = vadd.f32 %v775, %v777
    %v779 = vadd.f32 %v776, %v777
    %v780 = vld [vmem:[%s3] sm:$0xff]
    %v781 = vld [vmem:[%s3 + $0x8] sm:$0xff]
    %v782 = vld [vmem:[%s3 + $0x10] sm:$0xff]
    %v783 = vld [vmem:[%s3 + $0x18] sm:$0xff]
    %v784 = vperm.slane %v103, 1
    %v786 = vsel %vm33, %v778, 0
    %v789 = vsel %vm33, %v779, 0
    %791 = vmatpush.msra.mxu0 0.0
    %792 = vmatpush.msra.mxu0 0.0
    %793 = vmatpush.msra.mxu0 0.0
    %794 = vmatpush.msra.mxu0 0.0
    %795 = vmatpush.msra.mxu0 0.0
    %796 = vmatpush.msra.mxu0 0.0
    %797 = vmatpush.msra.mxu0 0.0
    %798 = vmatpush.msra.mxu0 0.0
    %799 = vmatpush.msra.mxu0 0.0
    %800 = vmatpush.msra.mxu0 0.0
    %801 = vmatpush.msra.mxu0 0.0
    %802 = vmatpush.msra.mxu0 0.0
    %803 = vmatpush.msra.mxu0 %v783
    %804 = vmatpush.msra.mxu0 %v782
    %805 = vmatpush.msra.mxu0 %v781
    %806 = vmatpush.msra.mxu0 %v780
    %807 = vmatmul.f32.gmra.mxu0 %v786
    %v808 = vpop.f32.mrf.mxu0
    %v809 = vadd.f32 %v784, %v808
    %810 = vmatmul.f32.gmra.mxu0 %v789
    %v811 = vpop.f32.mrf.mxu0
    %v812 = vadd.f32 %v784, %v811
    %813 = vdwg.mxu0
    %v814 = vmul.f32 %v809, 0.5
    %v815 = vmul.f32 %v812, 0.5
    %v816 = vmul.f32 %v809, 0.044715
    %v817 = vmul.f32 %v812, 0.044715
    %v818 = vmul.f32 %v816, %v809
    %v819 = vmul.f32 %v817, %v812
    %v820 = vmul.f32 %v818, %v809
    %v821 = vmul.f32 %v819, %v812
    %v822 = vadd.f32 %v809, %v820
    %v823 = vadd.f32 %v812, %v821
    %v824 = vmul.f32 %v822, 0.7978846
    %v825 = vmul.f32 %v823, 0.7978846
    %v826 = vtanh.pop %v824
    %v827 = vtanh.pop %v825
    %v828 = vadd.f32 %v826, 1.0
    %v829 = vadd.f32 %v827, 1.0
    %v830 = vmul.f32 %v814, %v828
    %v831 = vmul.f32 %v815, %v829
    %v832 = vperm.slane %v116, 3
    %vm833 = vcmask 523264
    %v835 = vsel %vm833, %v830, 0
    %v838 = vsel %vm833, %v831, 0
    %840 = vmatpush.msra.mxu0 0.0
    %841 = vmatpush.msra.mxu0 0.0
    %842 = vmatpush.msra.mxu0 0.0
    %843 = vmatpush.msra.mxu0 0.0
    %844 = vmatpush.msra.mxu0 0.0
    %845 = vmatpush.msra.mxu0 0.0
    %846 = vmatpush.msra.mxu0 0.0
    %847 = vmatpush.msra.mxu0 0.0
    %848 = vmatpush.msra.mxu0 %v115
    %849 = vmatpush.msra.mxu0 %v114
    %850 = vmatpush.msra.mxu0 %v113
    %851 = vmatpush.msra.mxu0 %v112
    %852 = vmatpush.msra.mxu0 %v111
    %853 = vmatpush.msra.mxu0 %v110
    %854 = vmatpush.msra.mxu0 %v109
    %855 = vmatpush.msra.mxu0 %v108
    %856 = vmatmul.f32.gmra.mxu0 %v835
    %v857 = vpop.f32.mrf.mxu0
    %v858 = vadd.f32 %v832, %v857
    %859 = vmatmul.f32.gmra.mxu0 %v838
    %v860 = vpop.f32.mrf.mxu0
    %v861 = vadd.f32 %v832, %v860
    %862 = vdwg.mxu0
    %v863 = vadd.f32 %v858, %v778
    %v864 = vadd.f32 %v861, %v779
    %v865 = vsel %vm33, %v863, 0.0
    %866 = vadd.xlane.f32.xlu0 %v865
    %v867 = vpop.xlane.xlu0 %866
    %v868 = vsel %vm33, %v864, 0.0
    %869 = vadd.xlane.f32.xlu0 %v868
    %v870 = vpop.xlane.xlu0 %869
    %v871 = vmul.f32 %v867, %v46
    %v872 = vmul.f32 %v870, %v46
    %v873 = vsub.f32 %v863, %v871
    %v874 = vsub.f32 %v864, %v872
    %v875 = vmul.f32 %v873, %v873
    %v876 = vmul.f32 %v874, %v874
    %v877 = vsel %vm33, %v875, 0.0
    %878 = vadd.xlane.f32.xlu0 %v877
    %v879 = vpop.xlane.xlu0 %878
    %v880 = vsel %vm33, %v876, 0.0
    %881 = vadd.xlane.f32.xlu0 %v880
    %v882 = vpop.xlane.xlu0 %881
    %v883 = vmul.f32 %v879, %v46
    %v884 = vmul.f32 %v882, %v46
    %v885 = vadd.f32 %v883, 1e-12
    %v886 = vadd.f32 %v884, 1e-12
    %v887 = vrsqrt.pop %v885
    %v888 = vmul.f32 %v887, %v885
    %v889 = vmul.f32 %v888, %v887
    %v890 = vmul.f32 0.5, %v889
    %v891 = vsub.f32 1.5, %v890
    %v892 = vmul.f32 %v887, %v891
    %vm893 = vweird.f32 %v885
    %vm894 = vweird.f32 %v887
    %vm895 = vmor %vm893, %vm894
    %v896 = vsel %vm895, %v887, %v892
    %v897 = vrsqrt.pop %v886
    %v898 = vmul.f32 %v897, %v886
    %v899 = vmul.f32 %v898, %v897
    %v900 = vmul.f32 0.5, %v899
    %v901 = vsub.f32 1.5, %v900
    %v902 = vmul.f32 %v897, %v901
    %vm903 = vweird.f32 %v886
    %vm904 = vweird.f32 %v897
    %vm905 = vmor %vm903, %vm904
    %v906 = vsel %vm905, %v897, %v902
    %v907 = vmul.f32 %v873, %v896
    %v908 = vmul.f32 %v874, %v906
    %v909 = vperm.slane %v116, 4
    %v910 = vmul.f32 %v907, %v909
    %v911 = vmul.f32 %v908, %v909
    %v912 = vperm.slane %v116, 5
    %v913 = vadd.f32 %v910, %v912
    %v914 = vadd.f32 %v911, %v912
    %s915 = scalar_lea.vmem %s2, 32
    %v916 = vld [vmem:[%s915] sm:$0xff]
    %v917 = vld [vmem:[%s915 + $0x8] sm:$0xff]
    %v918 = vld [vmem:[%s915 + $0x10] sm:$0xff]
    %v919 = vld [vmem:[%s915 + $0x18] sm:$0xff]
    %s920 = scalar_lea.vmem %s6, 2
    %v921 = vld [vmem:[%s920] sm:$0x3]
    %s922 = scalar_lea.vmem %s4, 96
    %v923 = vld [vmem:[%s922] sm:$0xff]
    %v924 = vld [vmem:[%s922 + $0x8] sm:$0xff]
    %v925 = vld [vmem:[%s922 + $0x10] sm:$0xff]
    %v926 = vld [vmem:[%s922 + $0x18] sm:$0xff]
    %v927 = vld [vmem:[%s922 + $0x20] sm:$0xff]
    %v928 = vld [vmem:[%s922 + $0x28] sm:$0xff]
    %v929 = vld [vmem:[%s922 + $0x30] sm:$0xff]
    %v930 = vld [vmem:[%s922 + $0x38] sm:$0xff]
    %v931 = vld [vmem:[%s922 + $0x40] sm:$0xff]
    %v932 = vld [vmem:[%s922 + $0x48] sm:$0xff]
    %v933 = vld [vmem:[%s922 + $0x50] sm:$0xff]
    %v934 = vld [vmem:[%s922 + $0x58] sm:$0xff]
    %s935 = scalar_lea.vmem %s5, 8
    %v936 = vld [vmem:[%s935] sm:$0x3f]
    %v937 = vperm.slane %v921, 0
    %v939 = vsel %vm33, %v913, 0
    %v942 = vsel %vm33, %v914, 0
    %944 = vmatpush.msra.mxu0 0.0
    %945 = vmatpush.msra.mxu0 0.0
    %946 = vmatpush.msra.mxu0 0.0
    %947 = vmatpush.msra.mxu0 0.0
    %948 = vmatpush.msra.mxu0 0.0
    %949 = vmatpush.msra.mxu0 0.0
    %950 = vmatpush.msra.mxu0 0.0
    %951 = vmatpush.msra.mxu0 0.0
    %952 = vmatpush.msra.mxu0 0.0
    %953 = vmatpush.msra.mxu0 0.0
    %954 = vmatpush.msra.mxu0 0.0
    %955 = vmatpush.msra.mxu0 0.0
    %956 = vmatpush.msra.mxu0 %v919
    %957 = vmatpush.msra.mxu0 %v918
    %958 = vmatpush.msra.mxu0 %v917
    %959 = vmatpush.msra.mxu0 %v916
    %960 = vmatmul.f32.gmra.mxu0 %v939
    %v961 = vpop.f32.mrf.mxu0
    %v962 = vadd.f32 %v937, %v961
    %963 = vmatmul.f32.gmra.mxu0 %v942
    %v964 = vpop.f32.mrf.mxu0
    %v965 = vadd.f32 %v937, %v964
    %966 = vdwg.mxu0
    %968 = vrot.lane.b32.xlu0 %v962, 96
    %v969 = vpop.permute.xlu0 %968
    %v970 = vsel %vm150, %v962, 0
    %v972 = vsel %vm150, %v969, 0
    %974 = vmatpush.xpose.msra.mxu0 0.0
    %975 = vmatpush.xpose.msra.mxu0 0.0
    %976 = vmatpush.xpose.msra.mxu0 0.0
    %977 = vmatpush.xpose.msra.mxu0 0.0
    %978 = vmatpush.xpose.msra.mxu0 0.0
    %979 = vmatpush.xpose.msra.mxu0 0.0
    %980 = vmatpush.xpose.msra.mxu0 0.0
    %981 = vmatpush.xpose.msra.mxu0 0.0
    %982 = vmatpush.xpose.msra.mxu0 0.0
    %983 = vmatpush.xpose.msra.mxu0 0.0
    %984 = vmatpush.xpose.msra.mxu0 0.0
    %985 = vmatpush.xpose.msra.mxu0 0.0
    %986 = vmatpush.xpose.msra.mxu0 0.0
    %987 = vmatpush.xpose.msra.mxu0 0.0
    %988 = vmatpush.xpose.msra.mxu0 0.0
    %989 = vmatpush.xpose.msra.mxu0 %v972
    %990 = vmatmul.f32.gmra.mxu0 %v970
    %v991 = vpop.f32.mrf.mxu0
    %v992 = vadd.f32 %v94, %v991
    %993 = vdwg.mxu0
    %v994 = vsel %vm150, %v992, -inf
    %995 = vmax.xlane.f32.xlu0 %v994
    %v996 = vpop.xlane.xlu0 %995
    %v997 = vsub.f32 %v992, %v996
    %v998 = vmul.f32 %v997, 1.442695
    %v999 = vpow.pop %v998
    %v1000 = vsel %vm150, %v999, 0.0
    %1001 = vadd.xlane.f32.xlu0 %v1000
    %v1002 = vpop.xlane.xlu0 %1001
    %v1003 = vrcp.pop %v1002
    %v1004 = vmul.f32 %v999, %v1003
    %1005 = vrot.lane.b32.xlu0 %v962, 64
    %v1006 = vpop.permute.xlu0 %1005
    %v1009 = vsel %vm150, %v1004, 0
    %1011 = vmatpush.msra.mxu0 0.0
    %1012 = vmatpush.msra.mxu0 0.0
    %1013 = vmatpush.msra.mxu0 0.0
    %1014 = vmatpush.msra.mxu0 0.0
    %1015 = vmatpush.msra.mxu0 0.0
    %1016 = vmatpush.msra.mxu0 0.0
    %1017 = vmatpush.msra.mxu0 0.0
    %1018 = vmatpush.msra.mxu0 0.0
    %1019 = vmatpush.msra.mxu0 0.0
    %1020 = vmatpush.msra.mxu0 0.0
    %1021 = vmatpush.msra.mxu0 0.0
    %1022 = vmatpush.msra.mxu0 0.0
    %1023 = vmatpush.msra.mxu0 0.0
    %1024 = vmatpush.msra.mxu0 0.0
    %1025 = vmatpush.msra.mxu0 0.0
    %1026 = vmatpush.msra.mxu0 %v1006
    %1027 = vmatmul.f32.gmra.mxu0 %v1009
    %v1028 = vpop.f32.mrf.mxu0
    %v1029 = vadd.f32 0.0, %v1028
    %1030 = vdwg.mxu0
    %1032 = vrot.lane.b32.xlu0 %v965, 96
    %v1033 = vpop.permute.xlu0 %1032
    %v1034 = vsel %vm150, %v965, 0
    %v1036 = vsel %vm150, %v1033, 0
    %1038 = vmatpush.xpose.msra.mxu0 0.0
    %1039 = vmatpush.xpose.msra.mxu0 0.0
    %1040 = vmatpush.xpose.msra.mxu0 0.0
    %1041 = vmatpush.xpose.msra.mxu0 0.0
    %1042 = vmatpush.xpose.msra.mxu0 0.0
    %1043 = vmatpush.xpose.msra.mxu0 0.0
    %1044 = vmatpush.xpose.msra.mxu0 0.0
    %1045 = vmatpush.xpose.msra.mxu0 0.0
    %1046 = vmatpush.xpose.msra.mxu0 0.0
    %1047 = vmatpush.xpose.msra.mxu0 0.0
    %1048 = vmatpush.xpose.msra.mxu0 0.0
    %1049 = vmatpush.xpose.msra.mxu0 0.0
    %1050 = vmatpush.xpose.msra.mxu0 0.0
    %1051 = vmatpush.xpose.msra.mxu0 0.0
    %1052 = vmatpush.xpose.msra.mxu0 0.0
    %1053 = vmatpush.xpose.msra.mxu0 %v1036
    %1054 = vmatmul.f32.gmra.mxu0 %v1034
    %v1055 = vpop.f32.mrf.mxu0
    %v1056 = vadd.f32 %v98, %v1055
    %1057 = vdwg.mxu0
    %v1058 = vsel %vm150, %v1056, -inf
    %1059 = vmax.xlane.f32.xlu0 %v1058
    %v1060 = vpop.xlane.xlu0 %1059
    %v1061 = vsub.f32 %v1056, %v1060
    %v1062 = vmul.f32 %v1061, 1.442695
    %v1063 = vpow.pop %v1062
    %v1064 = vsel %vm150, %v1063, 0.0
    %1065 = vadd.xlane.f32.xlu0 %v1064
    %v1066 = vpop.xlane.xlu0 %1065
    %v1067 = vrcp.pop %v1066
    %v1068 = vmul.f32 %v1063, %v1067
    %1069 = vrot.lane.b32.xlu0 %v965, 64
    %v1070 = vpop.permute.xlu0 %1069
    %v1073 = vsel %vm150, %v1068, 0
    %1075 = vmatpush.msra.mxu0 0.0
    %1076 = vmatpush.msra.mxu0 0.0
    %1077 = vmatpush.msra.mxu0 0.0
    %1078 = vmatpush.msra.mxu0 0.0
    %1079 = vmatpush.msra.mxu0 0.0
    %1080 = vmatpush.msra.mxu0 0.0
    %1081 = vmatpush.msra.mxu0 0.0
    %1082 = vmatpush.msra.mxu0 0.0
    %1083 = vmatpush.msra.mxu0 0.0
    %1084 = vmatpush.msra.mxu0 0.0
    %1085 = vmatpush.msra.mxu0 0.0
    %1086 = vmatpush.msra.mxu0 0.0
    %1087 = vmatpush.msra.mxu0 0.0
    %1088 = vmatpush.msra.mxu0 0.0
    %1089 = vmatpush.msra.mxu0 0.0
    %1090 = vmatpush.msra.mxu0 %v1070
    %1091 = vmatmul.f32.gmra.mxu0 %v1073
    %v1092 = vpop.f32.mrf.mxu0
    %v1093 = vadd.f32 0.0, %v1092
    %1094 = vdwg.mxu0
    %1095 = vrot.lane.b32.xlu0 %v962, 120
    %v1096 = vpop.permute.xlu0 %1095
    %1097 = vrot.lane.b32.xlu0 %v962, 88
    %v1098 = vpop.permute.xlu0 %1097
    %v1099 = vsel %vm150, %v1096, 0
    %v1101 = vsel %vm150, %v1098, 0
    %1103 = vmatpush.xpose.msra.mxu0 0.0
    %1104 = vmatpush.xpose.msra.mxu0 0.0
    %1105 = vmatpush.xpose.msra.mxu0 0.0
    %1106 = vmatpush.xpose.msra.mxu0 0.0
    %1107 = vmatpush.xpose.msra.mxu0 0.0
    %1108 = vmatpush.xpose.msra.mxu0 0.0
    %1109 = vmatpush.xpose.msra.mxu0 0.0
    %1110 = vmatpush.xpose.msra.mxu0 0.0
    %1111 = vmatpush.xpose.msra.mxu0 0.0
    %1112 = vmatpush.xpose.msra.mxu0 0.0
    %1113 = vmatpush.xpose.msra.mxu0 0.0
    %1114 = vmatpush.xpose.msra.mxu0 0.0
    %1115 = vmatpush.xpose.msra.mxu0 0.0
    %1116 = vmatpush.xpose.msra.mxu0 0.0
    %1117 = vmatpush.xpose.msra.mxu0 0.0
    %1118 = vmatpush.xpose.msra.mxu0 %v1101
    %1119 = vmatmul.f32.gmra.mxu0 %v1099
    %v1120 = vpop.f32.mrf.mxu0
    %v1121 = vadd.f32 %v94, %v1120
    %1122 = vdwg.mxu0
    %v1123 = vsel %vm150, %v1121, -inf
    %1124 = vmax.xlane.f32.xlu0 %v1123
    %v1125 = vpop.xlane.xlu0 %1124
    %v1126 = vsub.f32 %v1121, %v1125
    %v1127 = vmul.f32 %v1126, 1.442695
    %v1128 = vpow.pop %v1127
    %v1129 = vsel %vm150, %v1128, 0.0
    %1130 = vadd.xlane.f32.xlu0 %v1129
    %v1131 = vpop.xlane.xlu0 %1130
    %v1132 = vrcp.pop %v1131
    %v1133 = vmul.f32 %v1128, %v1132
    %1134 = vrot.lane.b32.xlu0 %v962, 56
    %v1135 = vpop.permute.xlu0 %1134
    %v1138 = vsel %vm150, %v1133, 0
    %1140 = vmatpush.msra.mxu0 0.0
    %1141 = vmatpush.msra.mxu0 0.0
    %1142 = vmatpush.msra.mxu0 0.0
    %1143 = vmatpush.msra.mxu0 0.0
    %1144 = vmatpush.msra.mxu0 0.0
    %1145 = vmatpush.msra.mxu0 0.0
    %1146 = vmatpush.msra.mxu0 0.0
    %1147 = vmatpush.msra.mxu0 0.0
    %1148 = vmatpush.msra.mxu0 0.0
    %1149 = vmatpush.msra.mxu0 0.0
    %1150 = vmatpush.msra.mxu0 0.0
    %1151 = vmatpush.msra.mxu0 0.0
    %1152 = vmatpush.msra.mxu0 0.0
    %1153 = vmatpush.msra.mxu0 0.0
    %1154 = vmatpush.msra.mxu0 0.0
    %1155 = vmatpush.msra.mxu0 %v1135
    %1156 = vmatmul.f32.gmra.mxu0 %v1138
    %v1157 = vpop.f32.mrf.mxu0
    %v1158 = vadd.f32 0.0, %v1157
    %1159 = vdwg.mxu0
    %1160 = vrot.lane.b32.xlu0 %v965, 120
    %v1161 = vpop.permute.xlu0 %1160
    %1162 = vrot.lane.b32.xlu0 %v965, 88
    %v1163 = vpop.permute.xlu0 %1162
    %v1164 = vsel %vm150, %v1161, 0
    %v1166 = vsel %vm150, %v1163, 0
    %1168 = vmatpush.xpose.msra.mxu0 0.0
    %1169 = vmatpush.xpose.msra.mxu0 0.0
    %1170 = vmatpush.xpose.msra.mxu0 0.0
    %1171 = vmatpush.xpose.msra.mxu0 0.0
    %1172 = vmatpush.xpose.msra.mxu0 0.0
    %1173 = vmatpush.xpose.msra.mxu0 0.0
    %1174 = vmatpush.xpose.msra.mxu0 0.0
    %1175 = vmatpush.xpose.msra.mxu0 0.0
    %1176 = vmatpush.xpose.msra.mxu0 0.0
    %1177 = vmatpush.xpose.msra.mxu0 0.0
    %1178 = vmatpush.xpose.msra.mxu0 0.0
    %1179 = vmatpush.xpose.msra.mxu0 0.0
    %1180 = vmatpush.xpose.msra.mxu0 0.0
    %1181 = vmatpush.xpose.msra.mxu0 0.0
    %1182 = vmatpush.xpose.msra.mxu0 0.0
    %1183 = vmatpush.xpose.msra.mxu0 %v1166
    %1184 = vmatmul.f32.gmra.mxu0 %v1164
    %v1185 = vpop.f32.mrf.mxu0
    %v1186 = vadd.f32 %v98, %v1185
    %1187 = vdwg.mxu0
    %v1188 = vsel %vm150, %v1186, -inf
    %1189 = vmax.xlane.f32.xlu0 %v1188
    %v1190 = vpop.xlane.xlu0 %1189
    %v1191 = vsub.f32 %v1186, %v1190
    %v1192 = vmul.f32 %v1191, 1.442695
    %v1193 = vpow.pop %v1192
    %v1194 = vsel %vm150, %v1193, 0.0
    %1195 = vadd.xlane.f32.xlu0 %v1194
    %v1196 = vpop.xlane.xlu0 %1195
    %v1197 = vrcp.pop %v1196
    %v1198 = vmul.f32 %v1193, %v1197
    %1199 = vrot.lane.b32.xlu0 %v965, 56
    %v1200 = vpop.permute.xlu0 %1199
    %v1203 = vsel %vm150, %v1198, 0
    %1205 = vmatpush.msra.mxu0 0.0
    %1206 = vmatpush.msra.mxu0 0.0
    %1207 = vmatpush.msra.mxu0 0.0
    %1208 = vmatpush.msra.mxu0 0.0
    %1209 = vmatpush.msra.mxu0 0.0
    %1210 = vmatpush.msra.mxu0 0.0
    %1211 = vmatpush.msra.mxu0 0.0
    %1212 = vmatpush.msra.mxu0 0.0
    %1213 = vmatpush.msra.mxu0 0.0
    %1214 = vmatpush.msra.mxu0 0.0
    %1215 = vmatpush.msra.mxu0 0.0
    %1216 = vmatpush.msra.mxu0 0.0
    %1217 = vmatpush.msra.mxu0 0.0
    %1218 = vmatpush.msra.mxu0 0.0
    %1219 = vmatpush.msra.mxu0 0.0
    %1220 = vmatpush.msra.mxu0 %v1200
    %1221 = vmatmul.f32.gmra.mxu0 %v1203
    %v1222 = vpop.f32.mrf.mxu0
    %v1223 = vadd.f32 0.0, %v1222
    %1224 = vdwg.mxu0
    %1225 = vrot.lane.b32.xlu0 %v962, 112
    %v1226 = vpop.permute.xlu0 %1225
    %1227 = vrot.lane.b32.xlu0 %v962, 80
    %v1228 = vpop.permute.xlu0 %1227
    %v1229 = vsel %vm150, %v1226, 0
    %v1231 = vsel %vm150, %v1228, 0
    %1233 = vmatpush.xpose.msra.mxu0 0.0
    %1234 = vmatpush.xpose.msra.mxu0 0.0
    %1235 = vmatpush.xpose.msra.mxu0 0.0
    %1236 = vmatpush.xpose.msra.mxu0 0.0
    %1237 = vmatpush.xpose.msra.mxu0 0.0
    %1238 = vmatpush.xpose.msra.mxu0 0.0
    %1239 = vmatpush.xpose.msra.mxu0 0.0
    %1240 = vmatpush.xpose.msra.mxu0 0.0
    %1241 = vmatpush.xpose.msra.mxu0 0.0
    %1242 = vmatpush.xpose.msra.mxu0 0.0
    %1243 = vmatpush.xpose.msra.mxu0 0.0
    %1244 = vmatpush.xpose.msra.mxu0 0.0
    %1245 = vmatpush.xpose.msra.mxu0 0.0
    %1246 = vmatpush.xpose.msra.mxu0 0.0
    %1247 = vmatpush.xpose.msra.mxu0 0.0
    %1248 = vmatpush.xpose.msra.mxu0 %v1231
    %1249 = vmatmul.f32.gmra.mxu0 %v1229
    %v1250 = vpop.f32.mrf.mxu0
    %v1251 = vadd.f32 %v94, %v1250
    %1252 = vdwg.mxu0
    %v1253 = vsel %vm150, %v1251, -inf
    %1254 = vmax.xlane.f32.xlu0 %v1253
    %v1255 = vpop.xlane.xlu0 %1254
    %v1256 = vsub.f32 %v1251, %v1255
    %v1257 = vmul.f32 %v1256, 1.442695
    %v1258 = vpow.pop %v1257
    %v1259 = vsel %vm150, %v1258, 0.0
    %1260 = vadd.xlane.f32.xlu0 %v1259
    %v1261 = vpop.xlane.xlu0 %1260
    %v1262 = vrcp.pop %v1261
    %v1263 = vmul.f32 %v1258, %v1262
    %1264 = vrot.lane.b32.xlu0 %v962, 48
    %v1265 = vpop.permute.xlu0 %1264
    %v1268 = vsel %vm150, %v1263, 0
    %1270 = vmatpush.msra.mxu0 0.0
    %1271 = vmatpush.msra.mxu0 0.0
    %1272 = vmatpush.msra.mxu0 0.0
    %1273 = vmatpush.msra.mxu0 0.0
    %1274 = vmatpush.msra.mxu0 0.0
    %1275 = vmatpush.msra.mxu0 0.0
    %1276 = vmatpush.msra.mxu0 0.0
    %1277 = vmatpush.msra.mxu0 0.0
    %1278 = vmatpush.msra.mxu0 0.0
    %1279 = vmatpush.msra.mxu0 0.0
    %1280 = vmatpush.msra.mxu0 0.0
    %1281 = vmatpush.msra.mxu0 0.0
    %1282 = vmatpush.msra.mxu0 0.0
    %1283 = vmatpush.msra.mxu0 0.0
    %1284 = vmatpush.msra.mxu0 0.0
    %1285 = vmatpush.msra.mxu0 %v1265
    %1286 = vmatmul.f32.gmra.mxu0 %v1268
    %v1287 = vpop.f32.mrf.mxu0
    %v1288 = vadd.f32 0.0, %v1287
    %1289 = vdwg.mxu0
    %1290 = vrot.lane.b32.xlu0 %v965, 112
    %v1291 = vpop.permute.xlu0 %1290
    %1292 = vrot.lane.b32.xlu0 %v965, 80
    %v1293 = vpop.permute.xlu0 %1292
    %v1294 = vsel %vm150, %v1291, 0
    %v1296 = vsel %vm150, %v1293, 0
    %1298 = vmatpush.xpose.msra.mxu0 0.0
    %1299 = vmatpush.xpose.msra.mxu0 0.0
    %1300 = vmatpush.xpose.msra.mxu0 0.0
    %1301 = vmatpush.xpose.msra.mxu0 0.0
    %1302 = vmatpush.xpose.msra.mxu0 0.0
    %1303 = vmatpush.xpose.msra.mxu0 0.0
    %1304 = vmatpush.xpose.msra.mxu0 0.0
    %1305 = vmatpush.xpose.msra.mxu0 0.0
    %1306 = vmatpush.xpose.msra.mxu0 0.0
    %1307 = vmatpush.xpose.msra.mxu0 0.0
    %1308 = vmatpush.xpose.msra.mxu0 0.0
    %1309 = vmatpush.xpose.msra.mxu0 0.0
    %1310 = vmatpush.xpose.msra.mxu0 0.0
    %1311 = vmatpush.xpose.msra.mxu0 0.0
    %1312 = vmatpush.xpose.msra.mxu0 0.0
    %1313 = vmatpush.xpose.msra.mxu0 %v1296
    %1314 = vmatmul.f32.gmra.mxu0 %v1294
    %v1315 = vpop.f32.mrf.mxu0
    %v1316 = vadd.f32 %v98, %v1315
    %1317 = vdwg.mxu0
    %v1318 = vsel %vm150, %v1316, -inf
    %1319 = vmax.xlane.f32.xlu0 %v1318
    %v1320 = vpop.xlane.xlu0 %1319
    %v1321 = vsub.f32 %v1316, %v1320
    %v1322 = vmul.f32 %v1321, 1.442695
    %v1323 = vpow.pop %v1322
    %v1324 = vsel %vm150, %v1323, 0.0
    %1325 = vadd.xlane.f32.xlu0 %v1324
    %v1326 = vpop.xlane.xlu0 %1325
    %v1327 = vrcp.pop %v1326
    %v1328 = vmul.f32 %v1323, %v1327
    %1329 = vrot.lane.b32.xlu0 %v965, 48
    %v1330 = vpop.permute.xlu0 %1329
    %v1333 = vsel %vm150, %v1328, 0
    %1335 = vmatpush.msra.mxu0 0.0
    %1336 = vmatpush.msra.mxu0 0.0
    %1337 = vmatpush.msra.mxu0 0.0
    %1338 = vmatpush.msra.mxu0 0.0
    %1339 = vmatpush.msra.mxu0 0.0
    %1340 = vmatpush.msra.mxu0 0.0
    %1341 = vmatpush.msra.mxu0 0.0
    %1342 = vmatpush.msra.mxu0 0.0
    %1343 = vmatpush.msra.mxu0 0.0
    %1344 = vmatpush.msra.mxu0 0.0
    %1345 = vmatpush.msra.mxu0 0.0
    %1346 = vmatpush.msra.mxu0 0.0
    %1347 = vmatpush.msra.mxu0 0.0
    %1348 = vmatpush.msra.mxu0 0.0
    %1349 = vmatpush.msra.mxu0 0.0
    %1350 = vmatpush.msra.mxu0 %v1330
    %1351 = vmatmul.f32.gmra.mxu0 %v1333
    %v1352 = vpop.f32.mrf.mxu0
    %v1353 = vadd.f32 0.0, %v1352
    %1354 = vdwg.mxu0
    %1355 = vrot.lane.b32.xlu0 %v962, 104
    %v1356 = vpop.permute.xlu0 %1355
    %1357 = vrot.lane.b32.xlu0 %v962, 72
    %v1358 = vpop.permute.xlu0 %1357
    %v1359 = vsel %vm150, %v1356, 0
    %v1361 = vsel %vm150, %v1358, 0
    %1363 = vmatpush.xpose.msra.mxu0 0.0
    %1364 = vmatpush.xpose.msra.mxu0 0.0
    %1365 = vmatpush.xpose.msra.mxu0 0.0
    %1366 = vmatpush.xpose.msra.mxu0 0.0
    %1367 = vmatpush.xpose.msra.mxu0 0.0
    %1368 = vmatpush.xpose.msra.mxu0 0.0
    %1369 = vmatpush.xpose.msra.mxu0 0.0
    %1370 = vmatpush.xpose.msra.mxu0 0.0
    %1371 = vmatpush.xpose.msra.mxu0 0.0
    %1372 = vmatpush.xpose.msra.mxu0 0.0
    %1373 = vmatpush.xpose.msra.mxu0 0.0
    %1374 = vmatpush.xpose.msra.mxu0 0.0
    %1375 = vmatpush.xpose.msra.mxu0 0.0
    %1376 = vmatpush.xpose.msra.mxu0 0.0
    %1377 = vmatpush.xpose.msra.mxu0 0.0
    %1378 = vmatpush.xpose.msra.mxu0 %v1361
    %1379 = vmatmul.f32.gmra.mxu0 %v1359
    %v1380 = vpop.f32.mrf.mxu0
    %v1381 = vadd.f32 %v94, %v1380
    %1382 = vdwg.mxu0
    %v1383 = vsel %vm150, %v1381, -inf
    %1384 = vmax.xlane.f32.xlu0 %v1383
    %v1385 = vpop.xlane.xlu0 %1384
    %v1386 = vsub.f32 %v1381, %v1385
    %v1387 = vmul.f32 %v1386, 1.442695
    %v1388 = vpow.pop %v1387
    %v1389 = vsel %vm150, %v1388, 0.0
    %1390 = vadd.xlane.f32.xlu0 %v1389
    %v1391 = vpop.xlane.xlu0 %1390
    %v1392 = vrcp.pop %v1391
    %v1393 = vmul.f32 %v1388, %v1392
    %1394 = vrot.lane.b32.xlu0 %v962, 40
    %v1395 = vpop.permute.xlu0 %1394
    %v1398 = vsel %vm150, %v1393, 0
    %1400 = vmatpush.msra.mxu0 0.0
    %1401 = vmatpush.msra.mxu0 0.0
    %1402 = vmatpush.msra.mxu0 0.0
    %1403 = vmatpush.msra.mxu0 0.0
    %1404 = vmatpush.msra.mxu0 0.0
    %1405 = vmatpush.msra.mxu0 0.0
    %1406 = vmatpush.msra.mxu0 0.0
    %1407 = vmatpush.msra.mxu0 0.0
    %1408 = vmatpush.msra.mxu0 0.0
    %1409 = vmatpush.msra.mxu0 0.0
    %1410 = vmatpush.msra.mxu0 0.0
    %1411 = vmatpush.msra.mxu0 0.0
    %1412 = vmatpush.msra.mxu0 0.0
    %1413 = vmatpush.msra.mxu0 0.0
    %1414 = vmatpush.msra.mxu0 0.0
    %1415 = vmatpush.msra.mxu0 %v1395
    %1416 = vmatmul.f32.gmra.mxu0 %v1398
    %v1417 = vpop.f32.mrf.mxu0
    %v1418 = vadd.f32 0.0, %v1417
    %1419 = vdwg.mxu0
    %1420 = vrot.lane.b32.xlu0 %v965, 104
    %v1421 = vpop.permute.xlu0 %1420
    %1422 = vrot.lane.b32.xlu0 %v965, 72
    %v1423 = vpop.permute.xlu0 %1422
    %v1424 = vsel %vm150, %v1421, 0
    %v1426 = vsel %vm150, %v1423, 0
    %1428 = vmatpush.xpose.msra.mxu0 0.0
    %1429 = vmatpush.xpose.msra.mxu0 0.0
    %1430 = vmatpush.xpose.msra.mxu0 0.0
    %1431 = vmatpush.xpose.msra.mxu0 0.0
    %1432 = vmatpush.xpose.msra.mxu0 0.0
    %1433 = vmatpush.xpose.msra.mxu0 0.0
    %1434 = vmatpush.xpose.msra.mxu0 0.0
    %1435 = vmatpush.xpose.msra.mxu0 0.0
    %1436 = vmatpush.xpose.msra.mxu0 0.0
    %1437 = vmatpush.xpose.msra.mxu0 0.0
    %1438 = vmatpush.xpose.msra.mxu0 0.0
    %1439 = vmatpush.xpose.msra.mxu0 0.0
    %1440 = vmatpush.xpose.msra.mxu0 0.0
    %1441 = vmatpush.xpose.msra.mxu0 0.0
    %1442 = vmatpush.xpose.msra.mxu0 0.0
    %1443 = vmatpush.xpose.msra.mxu0 %v1426
    %1444 = vmatmul.f32.gmra.mxu0 %v1424
    %v1445 = vpop.f32.mrf.mxu0
    %v1446 = vadd.f32 %v98, %v1445
    %1447 = vdwg.mxu0
    %v1448 = vsel %vm150, %v1446, -inf
    %1449 = vmax.xlane.f32.xlu0 %v1448
    %v1450 = vpop.xlane.xlu0 %1449
    %v1451 = vsub.f32 %v1446, %v1450
    %v1452 = vmul.f32 %v1451, 1.442695
    %v1453 = vpow.pop %v1452
    %v1454 = vsel %vm150, %v1453, 0.0
    %1455 = vadd.xlane.f32.xlu0 %v1454
    %v1456 = vpop.xlane.xlu0 %1455
    %v1457 = vrcp.pop %v1456
    %v1458 = vmul.f32 %v1453, %v1457
    %1459 = vrot.lane.b32.xlu0 %v965, 40
    %v1460 = vpop.permute.xlu0 %1459
    %v1463 = vsel %vm150, %v1458, 0
    %1465 = vmatpush.msra.mxu0 0.0
    %1466 = vmatpush.msra.mxu0 0.0
    %1467 = vmatpush.msra.mxu0 0.0
    %1468 = vmatpush.msra.mxu0 0.0
    %1469 = vmatpush.msra.mxu0 0.0
    %1470 = vmatpush.msra.mxu0 0.0
    %1471 = vmatpush.msra.mxu0 0.0
    %1472 = vmatpush.msra.mxu0 0.0
    %1473 = vmatpush.msra.mxu0 0.0
    %1474 = vmatpush.msra.mxu0 0.0
    %1475 = vmatpush.msra.mxu0 0.0
    %1476 = vmatpush.msra.mxu0 0.0
    %1477 = vmatpush.msra.mxu0 0.0
    %1478 = vmatpush.msra.mxu0 0.0
    %1479 = vmatpush.msra.mxu0 0.0
    %1480 = vmatpush.msra.mxu0 %v1460
    %1481 = vmatmul.f32.gmra.mxu0 %v1463
    %v1482 = vpop.f32.mrf.mxu0
    %v1483 = vadd.f32 0.0, %v1482
    %1484 = vdwg.mxu0
    %1487 = vrot.lane.b32.xlu0 %v1158, 8
    %v1488 = vpop.permute.xlu0 %1487
    %1489 = vrot.lane.b32.xlu0 %v1223, 8
    %v1490 = vpop.permute.xlu0 %1489
    %1495 = vrot.lane.b32.xlu0 %v1288, 16
    %v1496 = vpop.permute.xlu0 %1495
    %1497 = vrot.lane.b32.xlu0 %v1353, 16
    %v1498 = vpop.permute.xlu0 %1497
    %1503 = vrot.lane.b32.xlu0 %v1418, 24
    %v1504 = vpop.permute.xlu0 %1503
    %1505 = vrot.lane.b32.xlu0 %v1483, 24
    %v1506 = vpop.permute.xlu0 %1505
    %v1509 = vsel %vm150, %v1029, %v1488
    %v1510 = vsel %vm150, %v1093, %v1490
    %v1511 = vsel %vm692, %v1509, %v1496
    %v1512 = vsel %vm692, %v1510, %v1498
    %v1513 = vsel %vm695, %v1511, %v1504
    %v1514 = vsel %vm695, %v1512, %v1506
    %v1515 = vperm.slane %v936, 0
    %v1517 = vsel %vm33, %v1513, 0
    %v1520 = vsel %vm33, %v1514, 0
    %1522 = vmatpush.msra.mxu0 0.0
    %1523 = vmatpush.msra.mxu0 0.0
    %1524 = vmatpush.msra.mxu0 0.0
    %1525 = vmatpush.msra.mxu0 0.0
    %1526 = vmatpush.msra.mxu0 0.0
    %1527 = vmatpush.msra.mxu0 0.0
    %1528 = vmatpush.msra.mxu0 0.0
    %1529 = vmatpush.msra.mxu0 0.0
    %1530 = vmatpush.msra.mxu0 0.0
    %1531 = vmatpush.msra.mxu0 0.0
    %1532 = vmatpush.msra.mxu0 0.0
    %1533 = vmatpush.msra.mxu0 0.0
    %1534 = vmatpush.msra.mxu0 %v926
    %1535 = vmatpush.msra.mxu0 %v925
    %1536 = vmatpush.msra.mxu0 %v924
    %1537 = vmatpush.msra.mxu0 %v923
    %1538 = vmatmul.f32.gmra.mxu0 %v1517
    %v1539 = vpop.f32.mrf.mxu0
    %v1540 = vadd.f32 %v1515, %v1539
    %1541 = vmatmul.f32.gmra.mxu0 %v1520
    %v1542 = vpop.f32.mrf.mxu0
    %v1543 = vadd.f32 %v1515, %v1542
    %1544 = vdwg.mxu0
    %v1545 = vadd.f32 %v1540, %v913
    %v1546 = vadd.f32 %v1543, %v914
    %v1547 = vsel %vm33, %v1545, 0.0
    %1548 = vadd.xlane.f32.xlu0 %v1547
    %v1549 = vpop.xlane.xlu0 %1548
    %v1550 = vsel %vm33, %v1546, 0.0
    %1551 = vadd.xlane.f32.xlu0 %v1550
    %v1552 = vpop.xlane.xlu0 %1551
    %v1553 = vmul.f32 %v1549, %v46
    %v1554 = vmul.f32 %v1552, %v46
    %v1555 = vsub.f32 %v1545, %v1553
    %v1556 = vsub.f32 %v1546, %v1554
    %v1557 = vmul.f32 %v1555, %v1555
    %v1558 = vmul.f32 %v1556, %v1556
    %v1559 = vsel %vm33, %v1557, 0.0
    %1560 = vadd.xlane.f32.xlu0 %v1559
    %v1561 = vpop.xlane.xlu0 %1560
    %v1562 = vsel %vm33, %v1558, 0.0
    %1563 = vadd.xlane.f32.xlu0 %v1562
    %v1564 = vpop.xlane.xlu0 %1563
    %v1565 = vmul.f32 %v1561, %v46
    %v1566 = vmul.f32 %v1564, %v46
    %v1567 = vadd.f32 %v1565, 1e-12
    %v1568 = vadd.f32 %v1566, 1e-12
    %v1569 = vrsqrt.pop %v1567
    %v1570 = vmul.f32 %v1569, %v1567
    %v1571 = vmul.f32 %v1570, %v1569
    %v1572 = vmul.f32 0.5, %v1571
    %v1573 = vsub.f32 1.5, %v1572
    %v1574 = vmul.f32 %v1569, %v1573
    %vm1575 = vweird.f32 %v1567
    %vm1576 = vweird.f32 %v1569
    %vm1577 = vmor %vm1575, %vm1576
    %v1578 = vsel %vm1577, %v1569, %v1574
    %v1579 = vrsqrt.pop %v1568
    %v1580 = vmul.f32 %v1579, %v1568
    %v1581 = vmul.f32 %v1580, %v1579
    %v1582 = vmul.f32 0.5, %v1581
    %v1583 = vsub.f32 1.5, %v1582
    %v1584 = vmul.f32 %v1579, %v1583
    %vm1585 = vweird.f32 %v1568
    %vm1586 = vweird.f32 %v1579
    %vm1587 = vmor %vm1585, %vm1586
    %v1588 = vsel %vm1587, %v1579, %v1584
    %v1589 = vmul.f32 %v1555, %v1578
    %v1590 = vmul.f32 %v1556, %v1588
    %v1591 = vperm.slane %v936, 1
    %v1592 = vmul.f32 %v1589, %v1591
    %v1593 = vmul.f32 %v1590, %v1591
    %v1594 = vperm.slane %v936, 2
    %v1595 = vadd.f32 %v1592, %v1594
    %v1596 = vadd.f32 %v1593, %v1594
    %s1597 = scalar_lea.vmem %s3, 32
    %v1598 = vld [vmem:[%s1597] sm:$0xff]
    %v1599 = vld [vmem:[%s1597 + $0x8] sm:$0xff]
    %v1600 = vld [vmem:[%s1597 + $0x10] sm:$0xff]
    %v1601 = vld [vmem:[%s1597 + $0x18] sm:$0xff]
    %v1602 = vperm.slane %v921, 1
    %v1604 = vsel %vm33, %v1595, 0
    %v1607 = vsel %vm33, %v1596, 0
    %1609 = vmatpush.msra.mxu0 0.0
    %1610 = vmatpush.msra.mxu0 0.0
    %1611 = vmatpush.msra.mxu0 0.0
    %1612 = vmatpush.msra.mxu0 0.0
    %1613 = vmatpush.msra.mxu0 0.0
    %1614 = vmatpush.msra.mxu0 0.0
    %1615 = vmatpush.msra.mxu0 0.0
    %1616 = vmatpush.msra.mxu0 0.0
    %1617 = vmatpush.msra.mxu0 0.0
    %1618 = vmatpush.msra.mxu0 0.0
    %1619 = vmatpush.msra.mxu0 0.0
    %1620 = vmatpush.msra.mxu0 0.0
    %1621 = vmatpush.msra.mxu0 %v1601
    %1622 = vmatpush.msra.mxu0 %v1600
    %1623 = vmatpush.msra.mxu0 %v1599
    %1624 = vmatpush.msra.mxu0 %v1598
    %1625 = vmatmul.f32.gmra.mxu0 %v1604
    %v1626 = vpop.f32.mrf.mxu0
    %v1627 = vadd.f32 %v1602, %v1626
    %1628 = vmatmul.f32.gmra.mxu0 %v1607
    %v1629 = vpop.f32.mrf.mxu0
    %v1630 = vadd.f32 %v1602, %v1629
    %1631 = vdwg.mxu0
    %v1632 = vmul.f32 %v1627, 0.5
    %v1633 = vmul.f32 %v1630, 0.5
    %v1634 = vmul.f32 %v1627, 0.044715
    %v1635 = vmul.f32 %v1630, 0.044715
    %v1636 = vmul.f32 %v1634, %v1627
    %v1637 = vmul.f32 %v1635, %v1630
    %v1638 = vmul.f32 %v1636, %v1627
    %v1639 = vmul.f32 %v1637, %v1630
    %v1640 = vadd.f32 %v1627, %v1638
    %v1641 = vadd.f32 %v1630, %v1639
    %v1642 = vmul.f32 %v1640, 0.7978846
    %v1643 = vmul.f32 %v1641, 0.7978846
    %v1644 = vtanh.pop %v1642
    %v1645 = vtanh.pop %v1643
    %v1646 = vadd.f32 %v1644, 1.0
    %v1647 = vadd.f32 %v1645, 1.0
    %v1648 = vmul.f32 %v1632, %v1646
    %v1649 = vmul.f32 %v1633, %v1647
    %v1650 = vperm.slane %v936, 3
    %v1652 = vsel %vm833, %v1648, 0
    %v1655 = vsel %vm833, %v1649, 0
    %1657 = vmatpush.msra.mxu0 0.0
    %1658 = vmatpush.msra.mxu0 0.0
    %1659 = vmatpush.msra.mxu0 0.0
    %1660 = vmatpush.msra.mxu0 0.0
    %1661 = vmatpush.msra.mxu0 0.0
    %1662 = vmatpush.msra.mxu0 0.0
    %1663 = vmatpush.msra.mxu0 0.0
    %1664 = vmatpush.msra.mxu0 0.0
    %1665 = vmatpush.msra.mxu0 %v934
    %1666 = vmatpush.msra.mxu0 %v933
    %1667 = vmatpush.msra.mxu0 %v932
    %1668 = vmatpush.msra.mxu0 %v931
    %1669 = vmatpush.msra.mxu0 %v930
    %1670 = vmatpush.msra.mxu0 %v929
    %1671 = vmatpush.msra.mxu0 %v928
    %1672 = vmatpush.msra.mxu0 %v927
    %1673 = vmatmul.f32.gmra.mxu0 %v1652
    %v1674 = vpop.f32.mrf.mxu0
    %v1675 = vadd.f32 %v1650, %v1674
    %1676 = vmatmul.f32.gmra.mxu0 %v1655
    %v1677 = vpop.f32.mrf.mxu0
    %v1678 = vadd.f32 %v1650, %v1677
    %1679 = vdwg.mxu0
    %v1680 = vadd.f32 %v1675, %v1595
    %v1681 = vadd.f32 %v1678, %v1596
    %v1682 = vsel %vm33, %v1680, 0.0
    %1683 = vadd.xlane.f32.xlu0 %v1682
    %v1684 = vpop.xlane.xlu0 %1683
    %v1685 = vsel %vm33, %v1681, 0.0
    %1686 = vadd.xlane.f32.xlu0 %v1685
    %v1687 = vpop.xlane.xlu0 %1686
    %v1688 = vmul.f32 %v1684, %v46
    %v1689 = vmul.f32 %v1687, %v46
    %v1690 = vsub.f32 %v1680, %v1688
    %v1691 = vsub.f32 %v1681, %v1689
    %v1692 = vmul.f32 %v1690, %v1690
    %v1693 = vmul.f32 %v1691, %v1691
    %v1694 = vsel %vm33, %v1692, 0.0
    %1695 = vadd.xlane.f32.xlu0 %v1694
    %v1696 = vpop.xlane.xlu0 %1695
    %v1697 = vsel %vm33, %v1693, 0.0
    %1698 = vadd.xlane.f32.xlu0 %v1697
    %v1699 = vpop.xlane.xlu0 %1698
    %v1700 = vmul.f32 %v1696, %v46
    %v1701 = vmul.f32 %v1699, %v46
    %v1702 = vadd.f32 %v1700, 1e-12
    %v1703 = vadd.f32 %v1701, 1e-12
    %v1704 = vrsqrt.pop %v1702
    %v1705 = vmul.f32 %v1704, %v1702
    %v1706 = vmul.f32 %v1705, %v1704
    %v1707 = vmul.f32 0.5, %v1706
    %v1708 = vsub.f32 1.5, %v1707
    %v1709 = vmul.f32 %v1704, %v1708
    %vm1710 = vweird.f32 %v1702
    %vm1711 = vweird.f32 %v1704
    %vm1712 = vmor %vm1710, %vm1711
    %v1713 = vsel %vm1712, %v1704, %v1709
    %v1714 = vrsqrt.pop %v1703
    %v1715 = vmul.f32 %v1714, %v1703
    %v1716 = vmul.f32 %v1715, %v1714
    %v1717 = vmul.f32 0.5, %v1716
    %v1718 = vsub.f32 1.5, %v1717
    %v1719 = vmul.f32 %v1714, %v1718
    %vm1720 = vweird.f32 %v1703
    %vm1721 = vweird.f32 %v1714
    %vm1722 = vmor %vm1720, %vm1721
    %v1723 = vsel %vm1722, %v1714, %v1719
    %v1724 = vmul.f32 %v1690, %v1713
    %v1725 = vmul.f32 %v1691, %v1723
    %v1726 = vperm.slane %v936, 4
    %v1727 = vmul.f32 %v1724, %v1726
    %v1728 = vmul.f32 %v1725, %v1726
    %v1729 = vperm.slane %v936, 5
    %v1730 = vadd.f32 %v1727, %v1729
    %v1731 = vadd.f32 %v1728, %v1729
    %v1733 = vrot.slane %v1731, 7
    %vm1735 = vcmask 1040384
    %v1736 = vsel %vm1735, %v1730, %v1733
    %v1737 = vperm.slane %v30, 2
    %v1739 = vrot.slane %v30, 3
    %v1741 = vsel %vm33, %v1736, 0
    %v1743 = vsel %vm33, %v1739, 0
    %1745 = vmatpush.xpose.msra.mxu0 0.0
    %1746 = vmatpush.xpose.msra.mxu0 0.0
    %1747 = vmatpush.xpose.msra.mxu0 0.0
    %1748 = vmatpush.xpose.msra.mxu0 0.0
    %1749 = vmatpush.xpose.msra.mxu0 0.0
    %1750 = vmatpush.xpose.msra.mxu0 0.0
    %1751 = vmatpush.xpose.msra.mxu0 0.0
    %1752 = vmatpush.xpose.msra.mxu0 0.0
    %1753 = vmatpush.xpose.msra.mxu0 0.0
    %1754 = vmatpush.xpose.msra.mxu0 0.0
    %1755 = vmatpush.xpose.msra.mxu0 0.0
    %1756 = vmatpush.xpose.msra.mxu0 0.0
    %1757 = vmatpush.xpose.msra.mxu0 0.0
    %1758 = vmatpush.xpose.msra.mxu0 0.0
    %1759 = vmatpush.xpose.msra.mxu0 0.0
    %1760 = vmatpush.xpose.msra.mxu0 %v1743
    %1761 = vmatmul.f32.gmra.mxu0 %v1741
    %v1762 = vpop.f32.mrf.mxu0
    %v1763 = vadd.f32 %v1737, %v1762
    %1764 = vdwg.mxu0
    %vm1765 = vcmask 9216
    %1766 = vst.msk [vmem:[#allocation2] sm:$0x3] %vm1765, %v1763
    // Predicated region
    $region34: #{bert_fv_forward.1} parent=1 // pred_check
      _
    $region35: #{bert_fv_forward.1} parent=1 // pred_check_branch
      %1768 = sbr.rel (0) target = $region37
    $region36: #{bert_fv_forward.1} parent=1 // pred_region
      %1770 = vsyncadd [#allocation3], 0
      %s1772 = sshll.u32 [#allocation2], 4
      %s1773 = int_to_ptr.vmem [resolvable:$true] %s1772
      %s1774 = sshll.u32 %s8, 4
      %s1775 = int_to_ptr.hbm [resolvable:$true] %s1774
      %1777 = dma.vmem_to_hbm [thread:$0]  %s1773, 32, %s1775, [#allocation3]
    $region37: #{bert_fv_forward.1} parent=1 // pred_fallthru
      _
    // Predicated region
    $region38: #{bert_fv_forward.1} parent=1 // pred_check
      _
    $region39: #{bert_fv_forward.1} parent=1 // pred_check_branch
      %1779 = sbr.rel (0) target = $region41
    $region40: #{bert_fv_forward.1} parent=1 // pred_region
      %1781 = dma.done [#allocation3], 32
    $region41: #{bert_fv_forward.1} parent=1 // pred_fallthru
      _
    %1782 = vsyncpa [#allocation3], 1

</llo_original>
